<compile_context>
chip_gen: v5e
topology: v5e:2x2
jax: 0.10.0
libtpu: 0.0.40
codegen_flags: <defaults>
</compile_context>

<pallas_src>
import functools

import jax
import jax.numpy as jnp
from jax import lax
from jax.experimental import pallas as pl
from jax.experimental.pallas import tpu as pltpu


def _disc_block_kernel(xp_ref, w_ref, b_ref, out_ref, *, th, Wo, Cin4, Cn):
    """One grid step = one image x one Cout tile x one block of `th` output rows.

    xp_ref : (1, Ho+1, Wo+1, 4*Cin)  parity-packed padded activations (bf16),
             VMEM-resident across all (co, rb) steps of an image.
    w_ref  : (4, 4*Cin, Cn)          window/parity-packed weights (bf16).
    b_ref  : (1, Cn)                 bias (f32).
    out_ref: (1, th, Wo, Cn)         output block.

    The 3x3 / stride-2 conv is expressed as 4 window matmuls: window (dh, dw)
    contracts the contiguous slab xp[0, row0+dh : row0+dh+th, dw : dw+Wo, :]
    (reshaped to (th*Wo, 4*Cin)) with w_ref[2*dh + dw]; (window, parity)
    combinations with no corresponding conv tap carry zero weights.
    """
    rb = pl.program_id(2)
    row0 = rb * th

    acc = jnp.zeros((th * Wo, Cn), jnp.float32)
    for dh in range(2):                                 # static 4-window unroll
        for dw in range(2):
            win = xp_ref[0, pl.ds(row0 + dh, th), pl.ds(dw, Wo), :]  # (th,Wo,4Cin)
            acc = acc + jnp.dot(win.reshape(th * Wo, Cin4),
                                w_ref[2 * dh + dw],
                                preferred_element_type=jnp.float32)

    acc = acc + b_ref[...].astype(jnp.float32)
    acc = jnp.where(acc >= 0.0, acc, 0.2 * acc)          # LeakyReLU(0.2)
    out_ref[...] = acc.reshape(1, th, Wo, Cn).astype(out_ref.dtype)


def _pick_row_tile(Ho, Wo, rows_per_step):
    if rows_per_step is None:
        rows_per_step = max(1, 512 // max(Wo, 1))        # target M = th*Wo ~= 512
    th = int(min(max(1, rows_per_step), Ho))
    while Ho % th:                                       # exact tiling of Ho
        th -= 1
    return th


@functools.partial(jax.jit, static_argnames=(
    "rows_per_step", "cout_tile", "single_buffer_consts", "out_dtype", "mxu_dtype"))
def discriminator_block_fwd(x_nchw, weight, bias, *, rows_per_step=None,
                            cout_tile=256, single_buffer_consts=True,
                            out_dtype=None, mxu_dtype=jnp.bfloat16):
    """Conv2d(Cin, Cout, 3, stride=2, padding=1) + LeakyReLU(0.2).

    Matches the only constructible PyTorch configuration (normalize=False).
    x_nchw: (N, Cin, H, W), weight: (Cout, Cin, 3, 3), bias: (Cout,)
    Returns (N, Cout, Ho, Wo) in PyTorch's NCHW convention.
    """
    N, Cin, H, W = x_nchw.shape
    Cout = weight.shape[0]
    stride, pad = 2, 1
    Ho = (H + 2 * pad - 3) // stride + 1
    Wo = (W + 2 * pad - 3) // stride + 1
    odt = jnp.dtype(out_dtype) if out_dtype is not None else x_nchw.dtype

    # Lane-dense output channels; tiled in `cn`-wide chunks (256 fills the full
    # v6e/v7x MXU N width; padding channels use zero weights, sliced off below).
    Cout_p = ((Cout + 127) // 128) * 128
    cn = max(128, (min(int(cout_tile), Cout_p) // 128) * 128)
    if Cout_p % cn:
        cn = 128
    Cin4 = 4 * Cin

    # ---- glue: pad + stride-2 parity split, packed along channels ----------
    # One packed array instead of four separate planes -> single HBM operand,
    # lane-dense K = 4*Cin in the kernel.
    x_nhwc = jnp.transpose(x_nchw, (0, 2, 3, 1))
    Hp, Wp = 2 * Ho + 2, 2 * Wo + 2                      # even padded extents
    xp = jnp.pad(x_nhwc, ((0, 0), (pad, Hp - H - pad),
                          (pad, Wp - W - pad), (0, 0)))
    x_pack = jnp.concatenate(
        [xp[:, rp::2, cp::2, :] for rp in range(2) for cp in range(2)],
        axis=-1).astype(mxu_dtype)                       # (N, Ho+1, Wo+1, 4*Cin)

    # ---- window/parity-packed weights (cross-correlation, like nn.Conv2d) --
    # w_pack[2*dh+dw, (2*rp+cp)*Cin + c, co] = w[kh=2*dh+rp, kw=2*dw+cp, c, co]
    # when kh,kw < 3, else 0.
    w_t = jnp.transpose(weight, (2, 3, 1, 0))            # (kh, kw, Cin, Cout)
    w_pack = jnp.zeros((2, 2, 4, Cin, Cout), w_t.dtype)
    for dh in range(2):
        for dw in range(2):
            for rp in range(2):
                for cp in range(2):
                    kh, kw = 2 * dh + rp, 2 * dw + cp
                    if kh < 3 and kw < 3:
                        w_pack = w_pack.at[dh, dw, 2 * rp + cp].set(w_t[kh, kw])
    w_pack = w_pack.reshape(4, Cin4, Cout)
    w_pack = jnp.pad(w_pack, ((0, 0), (0, 0), (0, Cout_p - Cout))).astype(mxu_dtype)
    b_row = jnp.pad(bias, (0, Cout_p - Cout)).reshape(1, Cout_p).astype(jnp.float32)

    th = _pick_row_tile(Ho, Wo, rows_per_step)
    n_rb = Ho // th
    n_co = Cout_p // cn
    grid = (N, n_co, n_rb)                               # rb innermost

    # VMEM budget: <= 3/4 of physical VMEM, capped at 96 MiB
    # (v5e/v6e: 128 MiB physical -> 96 MiB; v7x: 64 MiB -> 48 MiB).
    try:
        phys_vmem = int(pltpu.get_tpu_info().vmem_capacity_bytes)
    except Exception:
        phys_vmem = 64 * 1024 * 1024                     # conservative fallback
    vmem_limit = int(min(96 * 1024 * 1024, (phys_vmem * 3) // 4))

    def const_spec(shape, index_map):
        # Constant-ish block index -> a single buffer is enough.
        if single_buffer_consts:
            return pl.BlockSpec(shape, index_map, pipeline_mode=pl.Buffered(1))
        return pl.BlockSpec(shape, index_map)

    in_specs = [
        const_spec((1, Ho + 1, Wo + 1, Cin4), lambda n, co, rb: (n, 0, 0, 0)),
        const_spec((4, Cin4, cn),             lambda n, co, rb: (0, 0, co)),
        const_spec((1, cn),                   lambda n, co, rb: (0, co)),
    ]
    out_spec = pl.BlockSpec((1, th, Wo, cn), lambda n, co, rb: (n, rb, 0, co))

    flops = 2 * N * Ho * Wo * 4 * Cin4 * Cout_p
    bytes_accessed = (x_pack.size * x_pack.dtype.itemsize
                      + w_pack.size * w_pack.dtype.itemsize
                      + b_row.size * b_row.dtype.itemsize
                      + N * Ho * Wo * Cout_p * jnp.dtype(odt).itemsize)

    kernel = functools.partial(_disc_block_kernel, th=th, Wo=Wo, Cin4=Cin4, Cn=cn)

    out_padded = pl.pallas_call(
        kernel,
        out_shape=jax.ShapeDtypeStruct((N, Ho, Wo, Cout_p), odt),
        grid=grid,
        in_specs=in_specs,
        out_specs=out_spec,
        compiler_params=pltpu.CompilerParams(
            # Only the batch axis is "parallel": a megacore split over N never
            # duplicates the packed-plane DMA across TensorCores.
            dimension_semantics=("parallel", "arbitrary", "arbitrary"),
            vmem_limit_bytes=vmem_limit),
        cost_estimate=pl.CostEstimate(flops=flops, transcendentals=0,
                                      bytes_accessed=bytes_accessed),
    )(x_pack, w_pack, b_row)

    out_nhwc = out_padded[..., :Cout]
    return jnp.transpose(out_nhwc, (0, 3, 1, 2))


# TODO(synk): the PyTorch __init__ with normalize=True references self.layers
# before it is assigned (it crashes), so only the normalize=False path
# (Conv2d + LeakyReLU) is a valid forward; BatchNorm2d is intentionally omitted.


if __name__ == "__main__":
    key = jax.random.PRNGKey(0)
    k_x, k_w, k_b = jax.random.split(key, 3)

    N, Cin, H, W = 2, 4, 16, 16
    Cout = 8

    x = jax.random.normal(k_x, (N, Cin, H, W), dtype=jnp.float32)
    # kaiming_normal-style deterministic init: std = sqrt(2 / fan_in)
    std = (2.0 / (Cin * 3 * 3)) ** 0.5
    weight = std * jax.random.normal(k_w, (Cout, Cin, 3, 3), dtype=jnp.float32)
    bias = 0.1 * jax.random.normal(k_b, (Cout,), dtype=jnp.float32)

    # Reference: plain XLA conv + bias + LeakyReLU(0.2) (same semantics).
    ref = lax.conv_general_dilated(
        x, weight, window_strides=(2, 2), padding=((1, 1), (1, 1)),
        dimension_numbers=("NCHW", "OIHW", "NCHW"))
    ref = ref + bias[None, :, None, None]
    ref = jnp.where(ref >= 0.0, ref, 0.2 * ref)

    single_buffer = True
    try:
        out = jax.block_until_ready(
            discriminator_block_fwd(x, weight, bias, single_buffer_consts=True))
    except Exception:
        # Fallback if this JAX build rejects pipeline_mode=pl.Buffered(1).
        single_buffer = False
        out = jax.block_until_ready(
            discriminator_block_fwd(x, weight, bias, single_buffer_consts=False))

    assert out.shape == (N, Cout, H // 2, W // 2)
    # bf16 MXU inputs with f32 accumulation -> loosened tolerance.
    assert bool(jnp.allclose(out, ref, atol=3e-2, rtol=3e-2))

    # Second config: small row tile -> several row blocks per image, exercising
    # the dynamic row-offset path of the kernel.
    out2 = jax.block_until_ready(
        discriminator_block_fwd(x, weight, bias, rows_per_step=2,
                                single_buffer_consts=single_buffer))
    assert bool(jnp.allclose(out2, ref, atol=3e-2, rtol=3e-2))

    print("KERNEL_OK")
</pallas_src>

<mosaic_0001>
module attributes {stable_mosaic.version = 11 : i64} {
  func.func @_disc_block_kernel(%arg0: i32, %arg1: i32, %arg2: i32, %arg3: memref<1x9x9x16xbf16, #tpu.memory_space<vmem>>, %arg4: memref<4x16x128xbf16, #tpu.memory_space<vmem>>, %arg5: memref<1x128xf32, #tpu.memory_space<vmem>>, %arg6: memref<1x8x8x128xf32, #tpu.memory_space<vmem>>) attributes {dimension_semantics = [#tpu.dimension_semantics<parallel>, #tpu.dimension_semantics<arbitrary>, #tpu.dimension_semantics<arbitrary>], iteration_bounds = array<i64: 2, 1, 1>, scalar_prefetch = 0 : i64, scratch_operands = 0 : i64, tpu.core_type = #tpu.core_type<tc>, window_params = [{pipeline_mode = #tpu.pipeline_mode<synchronous>, transform_indices = @transform_0, window_bounds = array<i64: 1, 9, 9, 16>}, {pipeline_mode = #tpu.pipeline_mode<synchronous>, transform_indices = @transform_1, window_bounds = array<i64: 4, 16, 128>}, {pipeline_mode = #tpu.pipeline_mode<synchronous>, transform_indices = @transform_2, window_bounds = array<i64: 1, 128>}, {transform_indices = @transform_3, window_bounds = array<i64: 1, 8, 8, 128>}]} {
    %c8_i32 = arith.constant 8 : i32
    %0 = arith.muli %arg2, %c8_i32 : i32
    %cst = arith.constant 0.000000e+00 : f32
    %1 = vector.broadcast %cst : f32 to vector<64x128xf32>
    %c0_i32 = arith.constant 0 : i32
    %2 = arith.addi %0, %c0_i32 : i32
    %c0 = arith.constant 0 : index
    %3 = arith.index_cast %2 : i32 to index
    %c0_0 = arith.constant 0 : index
    %c0_1 = arith.constant 0 : index
    %4 = vector.load %arg3[%c0, %3, %c0_0, %c0_1] : memref<1x9x9x16xbf16, #tpu.memory_space<vmem>>, vector<1x8x8x16xbf16>
    %5 = vector.shape_cast %4 : vector<1x8x8x16xbf16> to vector<8x8x16xbf16>
    %6 = vector.shape_cast %5 : vector<8x8x16xbf16> to vector<64x16xbf16>
    %c0_2 = arith.constant 0 : index
    %c0_3 = arith.constant 0 : index
    %c0_4 = arith.constant 0 : index
    %7 = vector.load %arg4[%c0_2, %c0_3, %c0_4] : memref<4x16x128xbf16, #tpu.memory_space<vmem>>, vector<1x16x128xbf16>
    %8 = vector.shape_cast %7 : vector<1x16x128xbf16> to vector<16x128xbf16>
    %cst_5 = arith.constant dense<0.000000e+00> : vector<64x128xf32>
    %9 = tpu.matmul %6, %8, %cst_5 {dimension_numbers = #tpu.dot_dimension_numbers<[1], [0], [0], [1], [0, 0, 1, 1], [], []>} : vector<64x16xbf16>, vector<16x128xbf16>, vector<64x128xf32> -> vector<64x128xf32>
    %10 = arith.addf %1, %9 : vector<64x128xf32>
    %c0_i32_6 = arith.constant 0 : i32
    %11 = arith.addi %0, %c0_i32_6 : i32
    %c0_7 = arith.constant 0 : index
    %12 = arith.index_cast %11 : i32 to index
    %c1 = arith.constant 1 : index
    %c0_8 = arith.constant 0 : index
    %13 = vector.load %arg3[%c0_7, %12, %c1, %c0_8] : memref<1x9x9x16xbf16, #tpu.memory_space<vmem>>, vector<1x8x8x16xbf16>
    %14 = vector.shape_cast %13 : vector<1x8x8x16xbf16> to vector<8x8x16xbf16>
    %15 = vector.shape_cast %14 : vector<8x8x16xbf16> to vector<64x16xbf16>
    %c1_9 = arith.constant 1 : index
    %c0_10 = arith.constant 0 : index
    %c0_11 = arith.constant 0 : index
    %16 = vector.load %arg4[%c1_9, %c0_10, %c0_11] : memref<4x16x128xbf16, #tpu.memory_space<vmem>>, vector<1x16x128xbf16>
    %17 = vector.shape_cast %16 : vector<1x16x128xbf16> to vector<16x128xbf16>
    %cst_12 = arith.constant dense<0.000000e+00> : vector<64x128xf32>
    %18 = tpu.matmul %15, %17, %cst_12 {dimension_numbers = #tpu.dot_dimension_numbers<[1], [0], [0], [1], [0, 0, 1, 1], [], []>} : vector<64x16xbf16>, vector<16x128xbf16>, vector<64x128xf32> -> vector<64x128xf32>
    %19 = arith.addf %10, %18 : vector<64x128xf32>
    %c1_i32 = arith.constant 1 : i32
    %20 = arith.addi %0, %c1_i32 : i32
    %c0_13 = arith.constant 0 : index
    %21 = arith.index_cast %20 : i32 to index
    %c0_14 = arith.constant 0 : index
    %c0_15 = arith.constant 0 : index
    %22 = vector.load %arg3[%c0_13, %21, %c0_14, %c0_15] : memref<1x9x9x16xbf16, #tpu.memory_space<vmem>>, vector<1x8x8x16xbf16>
    %23 = vector.shape_cast %22 : vector<1x8x8x16xbf16> to vector<8x8x16xbf16>
    %24 = vector.shape_cast %23 : vector<8x8x16xbf16> to vector<64x16xbf16>
    %c2 = arith.constant 2 : index
    %c0_16 = arith.constant 0 : index
    %c0_17 = arith.constant 0 : index
    %25 = vector.load %arg4[%c2, %c0_16, %c0_17] : memref<4x16x128xbf16, #tpu.memory_space<vmem>>, vector<1x16x128xbf16>
    %26 = vector.shape_cast %25 : vector<1x16x128xbf16> to vector<16x128xbf16>
    %cst_18 = arith.constant dense<0.000000e+00> : vector<64x128xf32>
    %27 = tpu.matmul %24, %26, %cst_18 {dimension_numbers = #tpu.dot_dimension_numbers<[1], [0], [0], [1], [0, 0, 1, 1], [], []>} : vector<64x16xbf16>, vector<16x128xbf16>, vector<64x128xf32> -> vector<64x128xf32>
    %28 = arith.addf %19, %27 : vector<64x128xf32>
    %c1_i32_19 = arith.constant 1 : i32
    %29 = arith.addi %0, %c1_i32_19 : i32
    %c0_20 = arith.constant 0 : index
    %30 = arith.index_cast %29 : i32 to index
    %c1_21 = arith.constant 1 : index
    %c0_22 = arith.constant 0 : index
    %31 = vector.load %arg3[%c0_20, %30, %c1_21, %c0_22] : memref<1x9x9x16xbf16, #tpu.memory_space<vmem>>, vector<1x8x8x16xbf16>
    %32 = vector.shape_cast %31 : vector<1x8x8x16xbf16> to vector<8x8x16xbf16>
    %33 = vector.shape_cast %32 : vector<8x8x16xbf16> to vector<64x16xbf16>
    %c3 = arith.constant 3 : index
    %c0_23 = arith.constant 0 : index
    %c0_24 = arith.constant 0 : index
    %34 = vector.load %arg4[%c3, %c0_23, %c0_24] : memref<4x16x128xbf16, #tpu.memory_space<vmem>>, vector<1x16x128xbf16>
    %35 = vector.shape_cast %34 : vector<1x16x128xbf16> to vector<16x128xbf16>
    %cst_25 = arith.constant dense<0.000000e+00> : vector<64x128xf32>
    %36 = tpu.matmul %33, %35, %cst_25 {dimension_numbers = #tpu.dot_dimension_numbers<[1], [0], [0], [1], [0, 0, 1, 1], [], []>} : vector<64x16xbf16>, vector<16x128xbf16>, vector<64x128xf32> -> vector<64x128xf32>
    %37 = arith.addf %28, %36 : vector<64x128xf32>
    %c0_26 = arith.constant 0 : index
    %c0_27 = arith.constant 0 : index
    %38 = vector.load %arg5[%c0_26, %c0_27] : memref<1x128xf32, #tpu.memory_space<vmem>>, vector<1x128xf32>
    %39 = vector.broadcast %38 : vector<1x128xf32> to vector<64x128xf32>
    %40 = arith.addf %37, %39 : vector<64x128xf32>
    %cst_28 = arith.constant 0.000000e+00 : f32
    %41 = vector.broadcast %cst_28 : f32 to vector<64x128xf32>
    %42 = arith.cmpf oge, %40, %41 : vector<64x128xf32>
    %cst_29 = arith.constant 2.000000e-01 : f32
    %43 = vector.broadcast %cst_29 : f32 to vector<64x128xf32>
    %44 = arith.mulf %43, %40 : vector<64x128xf32>
    %45 = arith.select %42, %40, %44 : vector<64x128xi1>, vector<64x128xf32>
    %46 = vector.shape_cast %45 : vector<64x128xf32> to vector<1x8x8x128xf32>
    %c0_30 = arith.constant 0 : index
    %c0_31 = arith.constant 0 : index
    %c0_32 = arith.constant 0 : index
    %c0_33 = arith.constant 0 : index
    %47 = vector.load %arg6[%c0_30, %c0_31, %c0_32, %c0_33] : memref<1x8x8x128xf32, #tpu.memory_space<vmem>>, vector<1x8x8x128xf32>
    tpu.vector_store %arg6[%c0_30, %c0_31, %c0_32, %c0_33], %46 {strides = array<i32>} : memref<1x8x8x128xf32, #tpu.memory_space<vmem>>, vector<1x8x8x128xf32>,
    return
  }
  func.func @transform_0(%arg0: i32, %arg1: i32, %arg2: i32) -> (i32, i32, i32, i32) {
    %c0_i32 = arith.constant 0 : i32
    %c0_i32_0 = arith.constant 0 : i32
    %c0_i32_1 = arith.constant 0 : i32
    %c0_i32_2 = arith.constant 0 : i32
    return %arg0, %c0_i32, %c0_i32_0, %c0_i32_1 : i32, i32, i32, i32
  }
  func.func @transform_1(%arg0: i32, %arg1: i32, %arg2: i32) -> (i32, i32, i32) {
    %c0_i32 = arith.constant 0 : i32
    %c0_i32_0 = arith.constant 0 : i32
    %c0_i32_1 = arith.constant 0 : i32
    return %c0_i32, %c0_i32_0, %arg1 : i32, i32, i32
  }
  func.func @transform_2(%arg0: i32, %arg1: i32, %arg2: i32) -> (i32, i32) {
    %c0_i32 = arith.constant 0 : i32
    %c0_i32_0 = arith.constant 0 : i32
    return %c0_i32, %arg1 : i32, i32
  }
  func.func @transform_3(%arg0: i32, %arg1: i32, %arg2: i32) -> (i32, i32, i32, i32) {
    %c0_i32 = arith.constant 0 : i32
    %c0_i32_0 = arith.constant 0 : i32
    return %arg0, %arg2, %c0_i32, %arg1 : i32, i32, i32, i32
  }
}

module attributes {stable_mosaic.version = 11 : i64} {
  func.func @_disc_block_kernel(%arg0: i32, %arg1: i32, %arg2: i32, %arg3: memref<1x9x9x16xbf16, #tpu.memory_space<vmem>>, %arg4: memref<4x16x128xbf16, #tpu.memory_space<vmem>>, %arg5: memref<1x128xf32, #tpu.memory_space<vmem>>, %arg6: memref<1x8x8x128xf32, #tpu.memory_space<vmem>>) attributes {dimension_semantics = [#tpu.dimension_semantics<parallel>, #tpu.dimension_semantics<arbitrary>, #tpu.dimension_semantics<arbitrary>], iteration_bounds = array<i64: 2, 1, 1>, scalar_prefetch = 0 : i64, scratch_operands = 0 : i64, tpu.core_type = #tpu.core_type<tc>, window_params = [{transform_indices = @transform_0, window_bounds = array<i64: 1, 9, 9, 16>}, {transform_indices = @transform_1, window_bounds = array<i64: 4, 16, 128>}, {transform_indices = @transform_2, window_bounds = array<i64: 1, 128>}, {transform_indices = @transform_3, window_bounds = array<i64: 1, 8, 8, 128>}]} {
    %c8_i32 = arith.constant 8 : i32
    %0 = arith.muli %arg2, %c8_i32 : i32
    %cst = arith.constant 0.000000e+00 : f32
    %1 = vector.broadcast %cst : f32 to vector<64x128xf32>
    %c0_i32 = arith.constant 0 : i32
    %2 = arith.addi %0, %c0_i32 : i32
    %c0 = arith.constant 0 : index
    %3 = arith.index_cast %2 : i32 to index
    %c0_0 = arith.constant 0 : index
    %c0_1 = arith.constant 0 : index
    %4 = vector.load %arg3[%c0, %3, %c0_0, %c0_1] : memref<1x9x9x16xbf16, #tpu.memory_space<vmem>>, vector<1x8x8x16xbf16>
    %5 = vector.shape_cast %4 : vector<1x8x8x16xbf16> to vector<8x8x16xbf16>
    %6 = vector.shape_cast %5 : vector<8x8x16xbf16> to vector<64x16xbf16>
    %c0_2 = arith.constant 0 : index
    %c0_3 = arith.constant 0 : index
    %c0_4 = arith.constant 0 : index
    %7 = vector.load %arg4[%c0_2, %c0_3, %c0_4] : memref<4x16x128xbf16, #tpu.memory_space<vmem>>, vector<1x16x128xbf16>
    %8 = vector.shape_cast %7 : vector<1x16x128xbf16> to vector<16x128xbf16>
    %cst_5 = arith.constant dense<0.000000e+00> : vector<64x128xf32>
    %9 = tpu.matmul %6, %8, %cst_5 {dimension_numbers = #tpu.dot_dimension_numbers<[1], [0], [0], [1], [0, 0, 1, 1], [], []>} : vector<64x16xbf16>, vector<16x128xbf16>, vector<64x128xf32> -> vector<64x128xf32>
    %10 = arith.addf %1, %9 : vector<64x128xf32>
    %c0_i32_6 = arith.constant 0 : i32
    %11 = arith.addi %0, %c0_i32_6 : i32
    %c0_7 = arith.constant 0 : index
    %12 = arith.index_cast %11 : i32 to index
    %c1 = arith.constant 1 : index
    %c0_8 = arith.constant 0 : index
    %13 = vector.load %arg3[%c0_7, %12, %c1, %c0_8] : memref<1x9x9x16xbf16, #tpu.memory_space<vmem>>, vector<1x8x8x16xbf16>
    %14 = vector.shape_cast %13 : vector<1x8x8x16xbf16> to vector<8x8x16xbf16>
    %15 = vector.shape_cast %14 : vector<8x8x16xbf16> to vector<64x16xbf16>
    %c1_9 = arith.constant 1 : index
    %c0_10 = arith.constant 0 : index
    %c0_11 = arith.constant 0 : index
    %16 = vector.load %arg4[%c1_9, %c0_10, %c0_11] : memref<4x16x128xbf16, #tpu.memory_space<vmem>>, vector<1x16x128xbf16>
    %17 = vector.shape_cast %16 : vector<1x16x128xbf16> to vector<16x128xbf16>
    %cst_12 = arith.constant dense<0.000000e+00> : vector<64x128xf32>
    %18 = tpu.matmul %15, %17, %cst_12 {dimension_numbers = #tpu.dot_dimension_numbers<[1], [0], [0], [1], [0, 0, 1, 1], [], []>} : vector<64x16xbf16>, vector<16x128xbf16>, vector<64x128xf32> -> vector<64x128xf32>
    %19 = arith.addf %10, %18 : vector<64x128xf32>
    %c1_i32 = arith.constant 1 : i32
    %20 = arith.addi %0, %c1_i32 : i32
    %c0_13 = arith.constant 0 : index
    %21 = arith.index_cast %20 : i32 to index
    %c0_14 = arith.constant 0 : index
    %c0_15 = arith.constant 0 : index
    %22 = vector.load %arg3[%c0_13, %21, %c0_14, %c0_15] : memref<1x9x9x16xbf16, #tpu.memory_space<vmem>>, vector<1x8x8x16xbf16>
    %23 = vector.shape_cast %22 : vector<1x8x8x16xbf16> to vector<8x8x16xbf16>
    %24 = vector.shape_cast %23 : vector<8x8x16xbf16> to vector<64x16xbf16>
    %c2 = arith.constant 2 : index
    %c0_16 = arith.constant 0 : index
    %c0_17 = arith.constant 0 : index
    %25 = vector.load %arg4[%c2, %c0_16, %c0_17] : memref<4x16x128xbf16, #tpu.memory_space<vmem>>, vector<1x16x128xbf16>
    %26 = vector.shape_cast %25 : vector<1x16x128xbf16> to vector<16x128xbf16>
    %cst_18 = arith.constant dense<0.000000e+00> : vector<64x128xf32>
    %27 = tpu.matmul %24, %26, %cst_18 {dimension_numbers = #tpu.dot_dimension_numbers<[1], [0], [0], [1], [0, 0, 1, 1], [], []>} : vector<64x16xbf16>, vector<16x128xbf16>, vector<64x128xf32> -> vector<64x128xf32>
    %28 = arith.addf %19, %27 : vector<64x128xf32>
    %c1_i32_19 = arith.constant 1 : i32
    %29 = arith.addi %0, %c1_i32_19 : i32
    %c0_20 = arith.constant 0 : index
    %30 = arith.index_cast %29 : i32 to index
    %c1_21 = arith.constant 1 : index
    %c0_22 = arith.constant 0 : index
    %31 = vector.load %arg3[%c0_20, %30, %c1_21, %c0_22] : memref<1x9x9x16xbf16, #tpu.memory_space<vmem>>, vector<1x8x8x16xbf16>
    %32 = vector.shape_cast %31 : vector<1x8x8x16xbf16> to vector<8x8x16xbf16>
    %33 = vector.shape_cast %32 : vector<8x8x16xbf16> to vector<64x16xbf16>
    %c3 = arith.constant 3 : index
    %c0_23 = arith.constant 0 : index
    %c0_24 = arith.constant 0 : index
    %34 = vector.load %arg4[%c3, %c0_23, %c0_24] : memref<4x16x128xbf16, #tpu.memory_space<vmem>>, vector<1x16x128xbf16>
    %35 = vector.shape_cast %34 : vector<1x16x128xbf16> to vector<16x128xbf16>
    %cst_25 = arith.constant dense<0.000000e+00> : vector<64x128xf32>
    %36 = tpu.matmul %33, %35, %cst_25 {dimension_numbers = #tpu.dot_dimension_numbers<[1], [0], [0], [1], [0, 0, 1, 1], [], []>} : vector<64x16xbf16>, vector<16x128xbf16>, vector<64x128xf32> -> vector<64x128xf32>
    %37 = arith.addf %28, %36 : vector<64x128xf32>
    %c0_26 = arith.constant 0 : index
    %c0_27 = arith.constant 0 : index
    %38 = vector.load %arg5[%c0_26, %c0_27] : memref<1x128xf32, #tpu.memory_space<vmem>>, vector<1x128xf32>
    %39 = vector.broadcast %38 : vector<1x128xf32> to vector<64x128xf32>
    %40 = arith.addf %37, %39 : vector<64x128xf32>
    %cst_28 = arith.constant 0.000000e+00 : f32
    %41 = vector.broadcast %cst_28 : f32 to vector<64x128xf32>
    %42 = arith.cmpf oge, %40, %41 : vector<64x128xf32>
    %cst_29 = arith.constant 2.000000e-01 : f32
    %43 = vector.broadcast %cst_29 : f32 to vector<64x128xf32>
    %44 = arith.mulf %43, %40 : vector<64x128xf32>
    %45 = arith.select %42, %40, %44 : vector<64x128xi1>, vector<64x128xf32>
    %46 = vector.shape_cast %45 : vector<64x128xf32> to vector<1x8x8x128xf32>
    %c0_30 = arith.constant 0 : index
    %c0_31 = arith.constant 0 : index
    %c0_32 = arith.constant 0 : index
    %c0_33 = arith.constant 0 : index
    %47 = vector.load %arg6[%c0_30, %c0_31, %c0_32, %c0_33] : memref<1x8x8x128xf32, #tpu.memory_space<vmem>>, vector<1x8x8x128xf32>
    tpu.vector_store %arg6[%c0_30, %c0_31, %c0_32, %c0_33], %46 {strides = array<i32>} : memref<1x8x8x128xf32, #tpu.memory_space<vmem>>, vector<1x8x8x128xf32>,
    return
  }
  func.func @transform_0(%arg0: i32, %arg1: i32, %arg2: i32) -> (i32, i32, i32, i32) {
    %c0_i32 = arith.constant 0 : i32
    %c0_i32_0 = arith.constant 0 : i32
    %c0_i32_1 = arith.constant 0 : i32
    %c0_i32_2 = arith.constant 0 : i32
    return %arg0, %c0_i32, %c0_i32_0, %c0_i32_1 : i32, i32, i32, i32
  }
  func.func @transform_1(%arg0: i32, %arg1: i32, %arg2: i32) -> (i32, i32, i32) {
    %c0_i32 = arith.constant 0 : i32
    %c0_i32_0 = arith.constant 0 : i32
    %c0_i32_1 = arith.constant 0 : i32
    return %c0_i32, %c0_i32_0, %arg1 : i32, i32, i32
  }
  func.func @transform_2(%arg0: i32, %arg1: i32, %arg2: i32) -> (i32, i32) {
    %c0_i32 = arith.constant 0 : i32
    %c0_i32_0 = arith.constant 0 : i32
    return %c0_i32, %arg1 : i32, i32
  }
  func.func @transform_3(%arg0: i32, %arg1: i32, %arg2: i32) -> (i32, i32, i32, i32) {
    %c0_i32 = arith.constant 0 : i32
    %c0_i32_0 = arith.constant 0 : i32
    return %arg0, %arg2, %c0_i32, %arg1 : i32, i32, i32, i32
  }
}

</mosaic_0001>

<llo_original>
// kernel: discriminator_block_fwd.1
$region0: #{discriminator_block_fwd.1}
  #allocation0 [shape = 'u32[]', space=smem, size = 0x4, offset = 0x4, fixed_abs, tag = 'smem constant byte address 0x4 - core index']
  #allocation1 [shape = 'u32[72,128]{1,0:T(1,128)}', space=vmem, size = 0x9000, scoped, tag = 'internal scratch']
  %s0 = inlined_call_operand.vmem [shape: bf16[2,9,9,16], index: 0, kind: input, shape index: {}]
  %s1 = inlined_call_operand.vmem [shape: bf16[4,16,128], index: 1, kind: input, shape index: {}]
  %s2 = inlined_call_operand.vmem [shape: f32[1,128], index: 2, kind: input, shape index: {}]
  %s3 = inlined_call_operand.vmem [shape: f32[2,8,8,128], index: 3, kind: output, shape index: {}]
  %s4 = sld [smem:[#allocation0]]
  $region45: #{discriminator_block_fwd.1} parent=0
    _
  %s6 = ssub.s32 1, %s4
  %s7 = scalar_select 0, %s6, %s4
  loop: start=0, step=1, limit=4
  $region2: #{discriminator_block_fwd.1} parent=0 // loop_pre_header
    _
  $region3: #{discriminator_block_fwd.1} parent=0 // loop_header
    %s9 = sphi 0, %s13
    %p10 = scmp.ge.s32.totalorder %s9, 4
    %s16 = sphi 0, %s35
    %s17 = sphi 0, %s31
    %s18 = sphi 0, %s27
    %s19 = sphi 0, %s16
    %s20 = sphi 0, %s17
    %s21 = sphi 0, %s18
    %s22 = sphi 0, %s19
    %s23 = sphi 0, %s20
    %s24 = sphi 0, %s21
    %s38 = sphi 0, %s40
    %s41 = sphi 0, %s38
    %s42 = sphi 0, %s41
    %s58 = sphi 0, %s42
    %s64 = sphi 0, %s66
    %s67 = sphi 0, %s64
    %s68 = sphi 0, %s67
    %s84 = sphi 0, %s68
    %s90 = sphi 0, %s92
    %s93 = sphi 0, %s90
    %s94 = sphi 0, %s93
    %s110 = sphi 0, %s94
    %s120 = sphi 0, %s122
    %s123 = sphi 0, %s120
    %s124 = sphi 0, %s123
    %s140 = sphi 0, %s124
  $region4: #{discriminator_block_fwd.1} parent=0 // loop_header_branch
    %12 = sbr.rel (%p10) target = $region8
  $region5: #{discriminator_block_fwd.1} parent=0 // loop_body
    %s14 = ssub.s32 %s9, 1
    %s15 = ssub.s32 %s9, 2
    %s25 = sadd.s32 1, %s18
    %p26 = scmp.ge.s32.totalorder %s25, 1
    %s27 = scalar_select %p26, 0, %s25
    %s28 = sadd.s32 1, %s17
    %s29 = scalar_select %p26, %s28, %s17
    %p30 = scmp.ge.s32.totalorder %s29, 1
    %s31 = scalar_select %p30, 0, %s29
    %s32 = sadd.s32 1, %s16
    %s33 = scalar_select %p30, %s32, %s16
    %p34 = scmp.ge.s32.totalorder %s33, 2
    %s35 = scalar_select %p34, 0, %s33
    %s36 = ssub.s32 %s16, %s35
    %p37 = scmp.eq.s32.totalorder %s36, 0
    %s39 = sadd.s32 %s38, 1
    %s40 = scalar_select %p37, %s38, %s39
    %p43 = pneg %p37
    %p44 = scmp.eq.s32.totalorder %s9, 1
    %p45 = por %p43, %p44
    %p46 = scmp.ne.s32.totalorder %s38, %s41
    %p47 = scmp.eq.s32.totalorder %s9, 0
    %p48 = por %p46, %p47
    %p49 = scmp.ne.s32.totalorder %s38, %s41
    %p50 = scmp.eq.s32.totalorder %s14, 1
    %p51 = por %p49, %p50
    %p52 = scmp.ne.s32.totalorder %s41, %s42
    %p53 = scmp.eq.s32.totalorder %s14, 0
    %p54 = por %p52, %p53
    %p55 = scmp.ne.s32.totalorder %s41, %s42
    %p56 = scmp.eq.s32.totalorder %s15, 1
    %p57 = por %p55, %p56
    %p59 = scmp.ne.s32.totalorder %s42, %s58
    %p60 = scmp.eq.s32.totalorder %s15, 0
    %p61 = por %p59, %p60
    %s62 = ssub.s32 %s17, %s31
    %p63 = scmp.eq.s32.totalorder %s62, 0
    %s65 = sadd.s32 %s64, 1
    %s66 = scalar_select %p63, %s64, %s65
    %p69 = pneg %p63
    %p70 = scmp.eq.s32.totalorder %s9, 1
    %p71 = por %p69, %p70
    %p72 = scmp.ne.s32.totalorder %s64, %s67
    %p73 = scmp.eq.s32.totalorder %s9, 0
    %p74 = por %p72, %p73
    %p75 = scmp.ne.s32.totalorder %s64, %s67
    %p76 = scmp.eq.s32.totalorder %s14, 1
    %p77 = por %p75, %p76
    %p78 = scmp.ne.s32.totalorder %s67, %s68
    %p79 = scmp.eq.s32.totalorder %s14, 0
    %p80 = por %p78, %p79
    %p81 = scmp.ne.s32.totalorder %s67, %s68
    %p82 = scmp.eq.s32.totalorder %s15, 1
    %p83 = por %p81, %p82
    %p85 = scmp.ne.s32.totalorder %s68, %s84
    %p86 = scmp.eq.s32.totalorder %s15, 0
    %p87 = por %p85, %p86
    %s88 = ssub.s32 %s17, %s31
    %p89 = scmp.eq.s32.totalorder %s88, 0
    %s91 = sadd.s32 %s90, 1
    %s92 = scalar_select %p89, %s90, %s91
    %p95 = pneg %p89
    %p96 = scmp.eq.s32.totalorder %s9, 1
    %p97 = por %p95, %p96
    %p98 = scmp.ne.s32.totalorder %s90, %s93
    %p99 = scmp.eq.s32.totalorder %s9, 0
    %p100 = por %p98, %p99
    %p101 = scmp.ne.s32.totalorder %s90, %s93
    %p102 = scmp.eq.s32.totalorder %s14, 1
    %p103 = por %p101, %p102
    %p104 = scmp.ne.s32.totalorder %s93, %s94
    %p105 = scmp.eq.s32.totalorder %s14, 0
    %p106 = por %p104, %p105
    %p107 = scmp.ne.s32.totalorder %s93, %s94
    %p108 = scmp.eq.s32.totalorder %s15, 1
    %p109 = por %p107, %p108
    %p111 = scmp.ne.s32.totalorder %s94, %s110
    %p112 = scmp.eq.s32.totalorder %s15, 0
    %p113 = por %p111, %p112
    %s114 = ssub.s32 %s16, %s35
    %s115 = ssub.s32 %s18, %s27
    %s116 = sor.u32 %s114, %s115
    %s117 = ssub.s32 %s17, %s31
    %s118 = sor.u32 %s116, %s117
    %p119 = scmp.eq.s32.totalorder %s118, 0
    %s121 = sadd.s32 %s120, 1
    %s122 = scalar_select %p119, %s120, %s121
    %p125 = pneg %p119
    %p126 = scmp.eq.s32.totalorder %s9, 1
    %p127 = por %p125, %p126
    %p128 = scmp.ne.s32.totalorder %s120, %s123
    %p129 = scmp.eq.s32.totalorder %s9, 0
    %p130 = por %p128, %p129
    %p131 = scmp.ne.s32.totalorder %s120, %s123
    %p132 = scmp.eq.s32.totalorder %s14, 1
    %p133 = por %p131, %p132
    %p134 = scmp.ne.s32.totalorder %s123, %s124
    %p135 = scmp.eq.s32.totalorder %s14, 0
    %p136 = por %p134, %p135
    %p137 = scmp.ne.s32.totalorder %s123, %s124
    %p138 = scmp.eq.s32.totalorder %s15, 1
    %p139 = por %p137, %p138
    %p141 = scmp.ne.s32.totalorder %s124, %s140
    %p142 = scmp.eq.s32.totalorder %s15, 0
    %p143 = por %p141, %p142
    %p144 = scmp.le.s32.totalorder 1, %s9
    %p145 = scmp.lt.s32.totalorder %s9, 3
    %p146 = pnand %p144, %p145
    %p147 = pneg %p146
    // Predicated region
    $region9: #{discriminator_block_fwd.1} parent=5 // pred_check
      _
    $region10: #{discriminator_block_fwd.1} parent=5 // pred_check_branch
      %149 = sbr.rel (%p146) target = $region12
    $region11: #{discriminator_block_fwd.1} parent=5 // pred_region
      %s150 = ssub.s32 %s9, 1
      // Predicated region
      $region13: #{discriminator_block_fwd.1} parent=11 // pred_check
        %p151 = pneg %p54
      $region14: #{discriminator_block_fwd.1} parent=11 // pred_check_branch
        %153 = sbr.rel (%p151) target = $region16
      $region15: #{discriminator_block_fwd.1} parent=11 // pred_region
        %p154 = scmp.lt.s32.totalorder %s19, 1
        %s155 = scalar_select %p154, %s19, 1
        %s156 = smul.addr %s155, 18
        %s157 = smul.addr %s156, 4
        %s158 = scalar_lea.vmem %s0, %s157
      $region16: #{discriminator_block_fwd.1} parent=11 // pred_fallthru
        _
      // Predicated region
      $region17: #{discriminator_block_fwd.1} parent=11 // pred_check
        %p159 = pneg %p80
      $region18: #{discriminator_block_fwd.1} parent=11 // pred_check_branch
        %161 = sbr.rel (%p159) target = $region20
      $region19: #{discriminator_block_fwd.1} parent=11 // pred_region
        %p162 = scmp.lt.s32.totalorder %s20, 0
        %s163 = scalar_select %p162, %s20, 0
        %s164 = smul.addr %s163, 4
        %s165 = scalar_lea.vmem %s1, %s164
      $region20: #{discriminator_block_fwd.1} parent=11 // pred_fallthru
        _
      // Predicated region
      $region21: #{discriminator_block_fwd.1} parent=11 // pred_check
        %p166 = pneg %p106
      $region22: #{discriminator_block_fwd.1} parent=11 // pred_check_branch
        %168 = sbr.rel (%p166) target = $region24
      $region23: #{discriminator_block_fwd.1} parent=11 // pred_region
        %p169 = scmp.lt.s32.totalorder %s20, 0
        %s170 = scalar_select %p169, %s20, 0
        %s171 = scalar_lea.vmem %s2, %s170
      $region24: #{discriminator_block_fwd.1} parent=11 // pred_fallthru
        _
    $region12: #{discriminator_block_fwd.1} parent=5 // pred_fallthru
      _
    %p172 = scmp.lt.s32.totalorder %s9, 2
    // Predicated region
    $region25: #{discriminator_block_fwd.1} parent=5 // pred_check
      %p173 = pneg %p172
    $region26: #{discriminator_block_fwd.1} parent=5 // pred_check_branch
      %175 = sbr.rel (%p173) target = $region28
    $region27: #{discriminator_block_fwd.1} parent=5 // pred_region
      _
    $region28: #{discriminator_block_fwd.1} parent=5 // pred_fallthru
      _
    %p176 = scmp.le.s32.totalorder 1, %s9
    %p177 = scmp.lt.s32.totalorder %s9, 3
    %p178 = pnand %p176, %p177
    %p179 = pneg %p178
    // Predicated region
    $region29: #{discriminator_block_fwd.1} parent=5 // pred_check
      _
    $region30: #{discriminator_block_fwd.1} parent=5 // pred_check_branch
      %181 = sbr.rel (%p178) target = $region32
    $region31: #{discriminator_block_fwd.1} parent=5 // pred_region
      %s182 = ssub.s32 %s9, 1
      %p183 = scmp.lt.s32.totalorder %s19, 1
      %s184 = scalar_select %p183, %s19, 1
      %s185 = smul.addr %s184, 18
      %s186 = smul.addr %s185, 4
      %s187 = scalar_lea.vmem %s0, %s186
      %p188 = pneg %p54
      %p189 = pneg %p51
      %p190 = scmp.lt.s32.totalorder %s20, 0
      %s191 = scalar_select %p190, %s20, 0
      %s192 = smul.addr %s191, 4
      %s193 = scalar_lea.vmem %s1, %s192
      %p194 = pneg %p80
      %p195 = pneg %p77
      %p196 = scmp.lt.s32.totalorder %s20, 0
      %s197 = scalar_select %p196, %s20, 0
      %s198 = scalar_lea.vmem %s2, %s197
      %p199 = pneg %p106
      %p200 = pneg %p103
      %p201 = pneg %p136
      %p202 = pneg %p133
      %s203 = smul.u32 8, %s21
      %p204 = scmp.lt.s32.totalorder %s19, 1
      %s205 = scalar_select %p204, %s19, 1
      %p206 = scmp.lt.s32.totalorder %s203, 7
      %s207 = scalar_select %p206, %s203, 7
      %p208 = scmp.lt.s32.totalorder %s20, 0
      %s209 = scalar_select %p208, %s20, 0
      %s210 = sadd.s32 %s209, %s207
      %s211 = smul.addr %s205, 8
      %s212 = sadd.s32 %s210, %s211
      %s213 = smul.addr %s212, 8
      %s214 = scalar_lea.vmem %s3, %s213
      %p215 = scmp.lt.s32.totalorder %s19, 1
      %s216 = scalar_select %p215, %s19, 1
      %s217 = smul.addr %s216, 18
      %s218 = smul.addr %s217, 4
      %s219 = scalar_lea.vmem %s0, %s218
      %p220 = scmp.lt.s32.totalorder %s20, 0
      %s221 = scalar_select %p220, %s20, 0
      %s222 = smul.addr %s221, 4
      %s223 = scalar_lea.vmem %s1, %s222
      %p224 = scmp.lt.s32.totalorder %s20, 0
      %s225 = scalar_select %p224, %s20, 0
      %s226 = scalar_lea.vmem %s2, %s225
      %s227 = smul.u32 8, %s21
      %p228 = scmp.lt.s32.totalorder %s19, 1
      %s229 = scalar_select %p228, %s19, 1
      %p230 = scmp.lt.s32.totalorder %s227, 7
      %s231 = scalar_select %p230, %s227, 7
      %p232 = scmp.lt.s32.totalorder %s20, 0
      %s233 = scalar_select %p232, %s20, 0
      %s234 = sadd.s32 %s233, %s231
      %s235 = smul.addr %s229, 8
      %s236 = sadd.s32 %s234, %s235
      %s237 = smul.addr %s236, 8
      %s238 = scalar_lea.vmem %s3, %s237
      %s239 = smul.u32 8, %s21
      %s241 = smul.u32 %s21, 8
      %s242 = smul.u32 %s241, 2
      %s243 = smul.addr %s242, 4
      %s244 = scalar_lea.vmem %s219, %s243
      %v245 = vld [vmem:[%s244] sm:$0xf]
      %v246 = vld [vmem:[%s244 + $0x8] sm:$0xf]
      %v247 = vld [vmem:[%s244 + $0x10] sm:$0xf]
      %v248 = vld [vmem:[%s244 + $0x18] sm:$0xf]
      %v249 = vld [vmem:[%s244 + $0x20] sm:$0xf]
      %v250 = vld [vmem:[%s244 + $0x28] sm:$0xf]
      %v251 = vld [vmem:[%s244 + $0x30] sm:$0xf]
      %v252 = vld [vmem:[%s244 + $0x38] sm:$0xf]
      %v253 = vld [vmem:[%s223] sm:$0xf]
      %v254 = vld [vmem:[%s223 + $0x4] sm:$0xf]
      %v255 = vld [vmem:[%s244 + $0x4] sm:$0x1]
      %v256 = vld [vmem:[%s244 + $0xc] sm:$0x1]
      %v257 = vld [vmem:[%s244 + $0x14] sm:$0x1]
      %v258 = vld [vmem:[%s244 + $0x1c] sm:$0x1]
      %v259 = vld [vmem:[%s244 + $0x24] sm:$0x1]
      %v260 = vld [vmem:[%s244 + $0x2c] sm:$0x1]
      %v261 = vld [vmem:[%s244 + $0x34] sm:$0x1]
      %v262 = vld [vmem:[%s244 + $0x3c] sm:$0x1]
      %vm263 = vsmask.f32 3328
      %vm264 = vsmask.f32 7440
      %vm265 = vmor %vm263, %vm264
      %v267 = vshrl.u32 %v245, 16
      %v269 = vrot.slane %v267, 4
      %v270 = vshll.u32 %v245, 16
      %v272 = vrot.slane %v270, 5
      %v273 = vor.u32 %v269, %v272
      %v274 = vrot.slane %v273, 4
      %v276 = vshll.u32 %v255, 16
      %v278 = vrot.slane %v276, 5
      %v279 = vsel %vm265, %v274, %v278
      %v281 = vshrl.u32 %v246, 16
      %v283 = vrot.slane %v281, 4
      %v284 = vshll.u32 %v246, 16
      %v286 = vrot.slane %v284, 5
      %v287 = vor.u32 %v283, %v286
      %v288 = vrot.slane %v287, 4
      %v290 = vshll.u32 %v256, 16
      %v292 = vrot.slane %v290, 5
      %v293 = vsel %vm265, %v288, %v292
      %v295 = vshrl.u32 %v247, 16
      %v297 = vrot.slane %v295, 4
      %v298 = vshll.u32 %v247, 16
      %v300 = vrot.slane %v298, 5
      %v301 = vor.u32 %v297, %v300
      %v302 = vrot.slane %v301, 4
      %v304 = vshll.u32 %v257, 16
      %v306 = vrot.slane %v304, 5
      %v307 = vsel %vm265, %v302, %v306
      %v309 = vshrl.u32 %v248, 16
      %v311 = vrot.slane %v309, 4
      %v312 = vshll.u32 %v248, 16
      %v314 = vrot.slane %v312, 5
      %v315 = vor.u32 %v311, %v314
      %v316 = vrot.slane %v315, 4
      %v318 = vshll.u32 %v258, 16
      %v320 = vrot.slane %v318, 5
      %v321 = vsel %vm265, %v316, %v320
      %v323 = vshrl.u32 %v249, 16
      %v325 = vrot.slane %v323, 4
      %v326 = vshll.u32 %v249, 16
      %v328 = vrot.slane %v326, 5
      %v329 = vor.u32 %v325, %v328
      %v330 = vrot.slane %v329, 4
      %v332 = vshll.u32 %v259, 16
      %v334 = vrot.slane %v332, 5
      %v335 = vsel %vm265, %v330, %v334
      %v337 = vshrl.u32 %v250, 16
      %v339 = vrot.slane %v337, 4
      %v340 = vshll.u32 %v250, 16
      %v342 = vrot.slane %v340, 5
      %v343 = vor.u32 %v339, %v342
      %v344 = vrot.slane %v343, 4
      %v346 = vshll.u32 %v260, 16
      %v348 = vrot.slane %v346, 5
      %v349 = vsel %vm265, %v344, %v348
      %v351 = vshrl.u32 %v251, 16
      %v353 = vrot.slane %v351, 4
      %v354 = vshll.u32 %v251, 16
      %v356 = vrot.slane %v354, 5
      %v357 = vor.u32 %v353, %v356
      %v358 = vrot.slane %v357, 4
      %v360 = vshll.u32 %v261, 16
      %v362 = vrot.slane %v360, 5
      %v363 = vsel %vm265, %v358, %v362
      %v365 = vshrl.u32 %v252, 16
      %v367 = vrot.slane %v365, 4
      %v368 = vshll.u32 %v252, 16
      %v370 = vrot.slane %v368, 5
      %v371 = vor.u32 %v367, %v370
      %v372 = vrot.slane %v371, 4
      %v374 = vshll.u32 %v262, 16
      %v376 = vrot.slane %v374, 5
      %v377 = vsel %vm265, %v372, %v376
      %s378 = scalar_lea.vmem %s223, 8
      %v379 = vld [vmem:[%s378] sm:$0xf]
      %v380 = vld [vmem:[%s378 + $0x4] sm:$0xf]
      %v381 = vunpack.c.l.b16 %v279
      %v382 = vunpack.c.l.b16 %v293
      %v383 = vunpack.c.l.b16 %v307
      %v384 = vunpack.c.l.b16 %v321
      %v385 = vunpack.c.l.b16 %v335
      %v386 = vunpack.c.l.b16 %v349
      %v387 = vunpack.c.l.b16 %v363
      %v388 = vunpack.c.l.b16 %v377
      %v389 = vpack.c.b16 %v382, %v381
      %v390 = vpack.c.b16 %v384, %v383
      %v391 = vpack.c.b16 %v386, %v385
      %v392 = vpack.c.b16 %v388, %v387
      %v395 = vunpack.c.l.b16 %v379
      %v396 = vunpack.c.l.b16 %v380
      %v397 = vpack.c.b16 %v396, %v395
      %vm399 = vcmask 130048
      %v401 = vsel %vm399, %v389, 0
      %v404 = vsel %vm399, %v390, 0
      %v407 = vsel %vm399, %v391, 0
      %v410 = vsel %vm399, %v392, 0
      %412 = vmatpush.bf16.msra.mxu0 0
      %413 = vmatpush.bf16.msra.mxu0 0
      %414 = vmatpush.bf16.msra.mxu0 0
      %415 = vmatpush.bf16.msra.mxu0 0
      %416 = vmatpush.bf16.msra.mxu0 0
      %417 = vmatpush.bf16.msra.mxu0 0
      %418 = vmatpush.bf16.msra.mxu0 0
      %419 = vmatpush.bf16.msra.mxu0 %v397
      %420 = vmatmul.bf16.gmra.mxu0 %v401
      %v421 = vpop.f32.mrf.mxu0
      %v422 = vadd.f32 0.0, %v421
      %v423 = vpop.f32.mrf.mxu0
      %v424 = vadd.f32 0.0, %v423
      %425 = vmatmul.bf16.gmra.mxu0 %v404
      %v426 = vpop.f32.mrf.mxu0
      %v427 = vadd.f32 0.0, %v426
      %v428 = vpop.f32.mrf.mxu0
      %v429 = vadd.f32 0.0, %v428
      %430 = vmatmul.bf16.gmra.mxu0 %v407
      %v431 = vpop.f32.mrf.mxu0
      %v432 = vadd.f32 0.0, %v431
      %v433 = vpop.f32.mrf.mxu0
      %v434 = vadd.f32 0.0, %v433
      %435 = vmatmul.bf16.gmra.mxu0 %v410
      %v436 = vpop.f32.mrf.mxu0
      %v437 = vadd.f32 0.0, %v436
      %v438 = vpop.f32.mrf.mxu0
      %v439 = vadd.f32 0.0, %v438
      %440 = vdwg.mxu0
      %v449 = vunpack.c.l.b16 %v245
      %v450 = vunpack.c.l.b16 %v246
      %v451 = vunpack.c.l.b16 %v247
      %v452 = vunpack.c.l.b16 %v248
      %v453 = vunpack.c.l.b16 %v249
      %v454 = vunpack.c.l.b16 %v250
      %v455 = vunpack.c.l.b16 %v251
      %v456 = vunpack.c.l.b16 %v252
      %v457 = vpack.c.b16 %v450, %v449
      %v458 = vpack.c.b16 %v452, %v451
      %v459 = vpack.c.b16 %v454, %v453
      %v460 = vpack.c.b16 %v456, %v455
      %v463 = vunpack.c.l.b16 %v253
      %v464 = vunpack.c.l.b16 %v254
      %v465 = vpack.c.b16 %v464, %v463
      %v468 = vsel %vm399, %v457, 0
      %v471 = vsel %vm399, %v458, 0
      %v474 = vsel %vm399, %v459, 0
      %v477 = vsel %vm399, %v460, 0
      %479 = vmatpush.bf16.msra.mxu0 0
      %480 = vmatpush.bf16.msra.mxu0 0
      %481 = vmatpush.bf16.msra.mxu0 0
      %482 = vmatpush.bf16.msra.mxu0 0
      %483 = vmatpush.bf16.msra.mxu0 0
      %484 = vmatpush.bf16.msra.mxu0 0
      %485 = vmatpush.bf16.msra.mxu0 0
      %486 = vmatpush.bf16.msra.mxu0 %v465
      %487 = vmatmul.bf16.gmra.mxu0 %v468
      %v488 = vpop.f32.mrf.mxu0
      %v489 = vadd.f32 %v422, %v488
      %v490 = vpop.f32.mrf.mxu0
      %v491 = vadd.f32 %v424, %v490
      %492 = vmatmul.bf16.gmra.mxu0 %v471
      %v493 = vpop.f32.mrf.mxu0
      %v494 = vadd.f32 %v427, %v493
      %v495 = vpop.f32.mrf.mxu0
      %v496 = vadd.f32 %v429, %v495
      %497 = vmatmul.bf16.gmra.mxu0 %v474
      %v498 = vpop.f32.mrf.mxu0
      %v499 = vadd.f32 %v432, %v498
      %v500 = vpop.f32.mrf.mxu0
      %v501 = vadd.f32 %v434, %v500
      %502 = vmatmul.bf16.gmra.mxu0 %v477
      %v503 = vpop.f32.mrf.mxu0
      %v504 = vadd.f32 %v437, %v503
      %v505 = vpop.f32.mrf.mxu0
      %v506 = vadd.f32 %v439, %v505
      %507 = vdwg.mxu0
      %s508 = sadd.s32 %s241, 1
      %s509 = smul.u32 %s508, 2
      %s510 = smul.addr %s509, 4
      %s511 = scalar_lea.vmem %s219, %s510
      %v512 = vld [vmem:[%s511] sm:$0xf]
      %v513 = vld [vmem:[%s511 + $0x8] sm:$0xf]
      %v514 = vld [vmem:[%s511 + $0x10] sm:$0xf]
      %v515 = vld [vmem:[%s511 + $0x18] sm:$0xf]
      %v516 = vld [vmem:[%s511 + $0x20] sm:$0xf]
      %v517 = vld [vmem:[%s511 + $0x28] sm:$0xf]
      %v518 = vld [vmem:[%s511 + $0x30] sm:$0xf]
      %v519 = vld [vmem:[%s511 + $0x38] sm:$0xf]
      %s520 = scalar_lea.vmem %s223, 16
      %v521 = vld [vmem:[%s520] sm:$0xf]
      %v522 = vld [vmem:[%s520 + $0x4] sm:$0xf]
      %v531 = vunpack.c.l.b16 %v512
      %v532 = vunpack.c.l.b16 %v513
      %v533 = vunpack.c.l.b16 %v514
      %v534 = vunpack.c.l.b16 %v515
      %v535 = vunpack.c.l.b16 %v516
      %v536 = vunpack.c.l.b16 %v517
      %v537 = vunpack.c.l.b16 %v518
      %v538 = vunpack.c.l.b16 %v519
      %v539 = vpack.c.b16 %v532, %v531
      %v540 = vpack.c.b16 %v534, %v533
      %v541 = vpack.c.b16 %v536, %v535
      %v542 = vpack.c.b16 %v538, %v537
      %v545 = vunpack.c.l.b16 %v521
      %v546 = vunpack.c.l.b16 %v522
      %v547 = vpack.c.b16 %v546, %v545
      %v550 = vsel %vm399, %v539, 0
      %v553 = vsel %vm399, %v540, 0
      %v556 = vsel %vm399, %v541, 0
      %v559 = vsel %vm399, %v542, 0
      %561 = vmatpush.bf16.msra.mxu0 0
      %562 = vmatpush.bf16.msra.mxu0 0
      %563 = vmatpush.bf16.msra.mxu0 0
      %564 = vmatpush.bf16.msra.mxu0 0
      %565 = vmatpush.bf16.msra.mxu0 0
      %566 = vmatpush.bf16.msra.mxu0 0
      %567 = vmatpush.bf16.msra.mxu0 0
      %568 = vmatpush.bf16.msra.mxu0 %v547
      %569 = vmatmul.bf16.gmra.mxu0 %v550
      %v570 = vpop.f32.mrf.mxu0
      %v571 = vadd.f32 0.0, %v570
      %v572 = vpop.f32.mrf.mxu0
      %v573 = vadd.f32 0.0, %v572
      %574 = vmatmul.bf16.gmra.mxu0 %v553
      %v575 = vpop.f32.mrf.mxu0
      %v576 = vadd.f32 0.0, %v575
      %v577 = vpop.f32.mrf.mxu0
      %v578 = vadd.f32 0.0, %v577
      %579 = vmatmul.bf16.gmra.mxu0 %v556
      %v580 = vpop.f32.mrf.mxu0
      %v581 = vadd.f32 0.0, %v580
      %v582 = vpop.f32.mrf.mxu0
      %v583 = vadd.f32 0.0, %v582
      %584 = vmatmul.bf16.gmra.mxu0 %v559
      %v585 = vpop.f32.mrf.mxu0
      %v586 = vadd.f32 0.0, %v585
      %v587 = vpop.f32.mrf.mxu0
      %v588 = vadd.f32 0.0, %v587
      %589 = vdwg.mxu0
      %v590 = vadd.f32 %v489, %v571
      %v591 = vadd.f32 %v491, %v573
      %v592 = vadd.f32 %v494, %v576
      %v593 = vadd.f32 %v496, %v578
      %v594 = vadd.f32 %v499, %v581
      %v595 = vadd.f32 %v501, %v583
      %v596 = vadd.f32 %v504, %v586
      %v597 = vadd.f32 %v506, %v588
      %v598 = vld [vmem:[%s511] sm:$0xf]
      %v599 = vld [vmem:[%s511 + $0x4] sm:$0x1]
      %v600 = vld [vmem:[%s511 + $0x8] sm:$0xf]
      %v601 = vld [vmem:[%s511 + $0xc] sm:$0x1]
      %v602 = vld [vmem:[%s511 + $0x10] sm:$0xf]
      %v603 = vld [vmem:[%s511 + $0x14] sm:$0x1]
      %v604 = vld [vmem:[%s511 + $0x18] sm:$0xf]
      %v605 = vld [vmem:[%s511 + $0x1c] sm:$0x1]
      %v606 = vld [vmem:[%s511 + $0x20] sm:$0xf]
      %v607 = vld [vmem:[%s511 + $0x24] sm:$0x1]
      %v608 = vld [vmem:[%s511 + $0x28] sm:$0xf]
      %v609 = vld [vmem:[%s511 + $0x2c] sm:$0x1]
      %v610 = vld [vmem:[%s511 + $0x30] sm:$0xf]
      %v611 = vld [vmem:[%s511 + $0x34] sm:$0x1]
      %v612 = vld [vmem:[%s511 + $0x38] sm:$0xf]
      %v613 = vld [vmem:[%s511 + $0x3c] sm:$0x1]
      %v615 = vshrl.u32 %v598, 16
      %v617 = vrot.slane %v615, 4
      %v618 = vshll.u32 %v598, 16
      %v620 = vrot.slane %v618, 5
      %v621 = vor.u32 %v617, %v620
      %v622 = vrot.slane %v621, 4
      %v624 = vshll.u32 %v599, 16
      %v626 = vrot.slane %v624, 5
      %v627 = vsel %vm265, %v622, %v626
      %v629 = vshrl.u32 %v600, 16
      %v631 = vrot.slane %v629, 4
      %v632 = vshll.u32 %v600, 16
      %v634 = vrot.slane %v632, 5
      %v635 = vor.u32 %v631, %v634
      %v636 = vrot.slane %v635, 4
      %v638 = vshll.u32 %v601, 16
      %v640 = vrot.slane %v638, 5
      %v641 = vsel %vm265, %v636, %v640
      %v643 = vshrl.u32 %v602, 16
      %v645 = vrot.slane %v643, 4
      %v646 = vshll.u32 %v602, 16
      %v648 = vrot.slane %v646, 5
      %v649 = vor.u32 %v645, %v648
      %v650 = vrot.slane %v649, 4
      %v652 = vshll.u32 %v603, 16
      %v654 = vrot.slane %v652, 5
      %v655 = vsel %vm265, %v650, %v654
      %v657 = vshrl.u32 %v604, 16
      %v659 = vrot.slane %v657, 4
      %v660 = vshll.u32 %v604, 16
      %v662 = vrot.slane %v660, 5
      %v663 = vor.u32 %v659, %v662
      %v664 = vrot.slane %v663, 4
      %v666 = vshll.u32 %v605, 16
      %v668 = vrot.slane %v666, 5
      %v669 = vsel %vm265, %v664, %v668
      %v671 = vshrl.u32 %v606, 16
      %v673 = vrot.slane %v671, 4
      %v674 = vshll.u32 %v606, 16
      %v676 = vrot.slane %v674, 5
      %v677 = vor.u32 %v673, %v676
      %v678 = vrot.slane %v677, 4
      %v680 = vshll.u32 %v607, 16
      %v682 = vrot.slane %v680, 5
      %v683 = vsel %vm265, %v678, %v682
      %v685 = vshrl.u32 %v608, 16
      %v687 = vrot.slane %v685, 4
      %v688 = vshll.u32 %v608, 16
      %v690 = vrot.slane %v688, 5
      %v691 = vor.u32 %v687, %v690
      %v692 = vrot.slane %v691, 4
      %v694 = vshll.u32 %v609, 16
      %v696 = vrot.slane %v694, 5
      %v697 = vsel %vm265, %v692, %v696
      %v699 = vshrl.u32 %v610, 16
      %v701 = vrot.slane %v699, 4
      %v702 = vshll.u32 %v610, 16
      %v704 = vrot.slane %v702, 5
      %v705 = vor.u32 %v701, %v704
      %v706 = vrot.slane %v705, 4
      %v708 = vshll.u32 %v611, 16
      %v710 = vrot.slane %v708, 5
      %v711 = vsel %vm265, %v706, %v710
      %v713 = vshrl.u32 %v612, 16
      %v715 = vrot.slane %v713, 4
      %v716 = vshll.u32 %v612, 16
      %v718 = vrot.slane %v716, 5
      %v719 = vor.u32 %v715, %v718
      %v720 = vrot.slane %v719, 4
      %v722 = vshll.u32 %v613, 16
      %v724 = vrot.slane %v722, 5
      %v725 = vsel %vm265, %v720, %v724
      %s726 = scalar_lea.vmem %s223, 24
      %v727 = vld [vmem:[%s726] sm:$0xf]
      %v728 = vld [vmem:[%s726 + $0x4] sm:$0xf]
      %v729 = vunpack.c.l.b16 %v627
      %v730 = vunpack.c.l.b16 %v641
      %v731 = vunpack.c.l.b16 %v655
      %v732 = vunpack.c.l.b16 %v669
      %v733 = vunpack.c.l.b16 %v683
      %v734 = vunpack.c.l.b16 %v697
      %v735 = vunpack.c.l.b16 %v711
      %v736 = vunpack.c.l.b16 %v725
      %v737 = vpack.c.b16 %v730, %v729
      %v738 = vpack.c.b16 %v732, %v731
      %v739 = vpack.c.b16 %v734, %v733
      %v740 = vpack.c.b16 %v736, %v735
      %v743 = vunpack.c.l.b16 %v727
      %v744 = vunpack.c.l.b16 %v728
      %v745 = vpack.c.b16 %v744, %v743
      %v748 = vsel %vm399, %v737, 0
      %v751 = vsel %vm399, %v738, 0
      %v754 = vsel %vm399, %v739, 0
      %v757 = vsel %vm399, %v740, 0
      %759 = vmatpush.bf16.msra.mxu0 0
      %760 = vmatpush.bf16.msra.mxu0 0
      %761 = vmatpush.bf16.msra.mxu0 0
      %762 = vmatpush.bf16.msra.mxu0 0
      %763 = vmatpush.bf16.msra.mxu0 0
      %764 = vmatpush.bf16.msra.mxu0 0
      %765 = vmatpush.bf16.msra.mxu0 0
      %766 = vmatpush.bf16.msra.mxu0 %v745
      %767 = vmatmul.bf16.gmra.mxu0 %v748
      %v768 = vpop.f32.mrf.mxu0
      %v769 = vadd.f32 0.0, %v768
      %v770 = vpop.f32.mrf.mxu0
      %v771 = vadd.f32 0.0, %v770
      %772 = vmatmul.bf16.gmra.mxu0 %v751
      %v773 = vpop.f32.mrf.mxu0
      %v774 = vadd.f32 0.0, %v773
      %v775 = vpop.f32.mrf.mxu0
      %v776 = vadd.f32 0.0, %v775
      %777 = vmatmul.bf16.gmra.mxu0 %v754
      %v778 = vpop.f32.mrf.mxu0
      %v779 = vadd.f32 0.0, %v778
      %v780 = vpop.f32.mrf.mxu0
      %v781 = vadd.f32 0.0, %v780
      %782 = vmatmul.bf16.gmra.mxu0 %v757
      %v783 = vpop.f32.mrf.mxu0
      %v784 = vadd.f32 0.0, %v783
      %v785 = vpop.f32.mrf.mxu0
      %v786 = vadd.f32 0.0, %v785
      %787 = vdwg.mxu0
      %v788 = vadd.f32 %v590, %v769
      %v789 = vadd.f32 %v591, %v771
      %v790 = vadd.f32 %v592, %v774
      %v791 = vadd.f32 %v593, %v776
      %v792 = vadd.f32 %v594, %v779
      %v793 = vadd.f32 %v595, %v781
      %v794 = vadd.f32 %v596, %v784
      %v795 = vadd.f32 %v597, %v786
      %v796 = vld [vmem:[%s226] sm:$0x1]
      %v798 = vperm.slane %v796, 0
      %v800 = vadd.f32 %v788, %v798
      %v801 = vadd.f32 %v789, %v798
      %v802 = vadd.f32 %v790, %v798
      %v803 = vadd.f32 %v791, %v798
      %v804 = vadd.f32 %v792, %v798
      %v805 = vadd.f32 %v793, %v798
      %v806 = vadd.f32 %v794, %v798
      %v807 = vadd.f32 %v795, %v798
      %vm808 = vcmp.ge.f32.partialorder %v800, 0.0
      %vm809 = vcmp.ge.f32.partialorder %v801, 0.0
      %vm810 = vcmp.ge.f32.partialorder %v802, 0.0
      %vm811 = vcmp.ge.f32.partialorder %v803, 0.0
      %vm812 = vcmp.ge.f32.partialorder %v804, 0.0
      %vm813 = vcmp.ge.f32.partialorder %v805, 0.0
      %vm814 = vcmp.ge.f32.partialorder %v806, 0.0
      %vm815 = vcmp.ge.f32.partialorder %v807, 0.0
      %v816 = vmul.f32 %v800, 0.2
      %v817 = vmul.f32 %v801, 0.2
      %v818 = vmul.f32 %v802, 0.2
      %v819 = vmul.f32 %v803, 0.2
      %v820 = vmul.f32 %v804, 0.2
      %v821 = vmul.f32 %v805, 0.2
      %v822 = vmul.f32 %v806, 0.2
      %v823 = vmul.f32 %v807, 0.2
      %v824 = vsel %vm808, %v800, %v816
      %v825 = vsel %vm809, %v801, %v817
      %v826 = vsel %vm810, %v802, %v818
      %v827 = vsel %vm811, %v803, %v819
      %v828 = vsel %vm812, %v804, %v820
      %v829 = vsel %vm813, %v805, %v821
      %v830 = vsel %vm814, %v806, %v822
      %v831 = vsel %vm815, %v807, %v823
      %832 = vst [vmem:[%s238] sm:$0xff] %v824
      %833 = vst [vmem:[%s238 + $0x8] sm:$0xff] %v825
      %834 = vst [vmem:[%s238 + $0x10] sm:$0xff] %v826
      %835 = vst [vmem:[%s238 + $0x18] sm:$0xff] %v827
      %836 = vst [vmem:[%s238 + $0x20] sm:$0xff] %v828
      %837 = vst [vmem:[%s238 + $0x28] sm:$0xff] %v829
      %838 = vst [vmem:[%s238 + $0x30] sm:$0xff] %v830
      %839 = vst [vmem:[%s238 + $0x38] sm:$0xff] %v831
      %s840 = smul.u32 8, %s21
      %p841 = scmp.lt.s32.totalorder %s19, 1
      %s842 = scalar_select %p841, %s19, 1
      %p843 = scmp.lt.s32.totalorder %s840, 7
      %s844 = scalar_select %p843, %s840, 7
      %p845 = scmp.lt.s32.totalorder %s20, 0
      %s846 = scalar_select %p845, %s20, 0
      %s847 = sadd.s32 %s846, %s844
      %s848 = smul.addr %s842, 8
      %s849 = sadd.s32 %s847, %s848
      %s850 = smul.addr %s849, 8
      %s851 = scalar_lea.vmem %s3, %s850
      // Predicated region
      $region33: #{discriminator_block_fwd.1} parent=31 // pred_check
        %p852 = pneg %p133
      $region34: #{discriminator_block_fwd.1} parent=31 // pred_check_branch
        %854 = sbr.rel (%p852) target = $region36
      $region35: #{discriminator_block_fwd.1} parent=31 // pred_region
        %s855 = smul.u32 8, %s21
      $region36: #{discriminator_block_fwd.1} parent=31 // pred_fallthru
        _
    $region32: #{discriminator_block_fwd.1} parent=5 // pred_fallthru
      _
    %p856 = scmp.le.s32.totalorder 2, %s9
    // Predicated region
    $region37: #{discriminator_block_fwd.1} parent=5 // pred_check
      %p857 = pneg %p856
    $region38: #{discriminator_block_fwd.1} parent=5 // pred_check_branch
      %859 = sbr.rel (%p857) target = $region40
    $region39: #{discriminator_block_fwd.1} parent=5 // pred_region
      %s860 = ssub.s32 %s9, 2
      // Predicated region
      $region41: #{discriminator_block_fwd.1} parent=39 // pred_check
        %p861 = pneg %p139
      $region42: #{discriminator_block_fwd.1} parent=39 // pred_check_branch
        %863 = sbr.rel (%p861) target = $region44
      $region43: #{discriminator_block_fwd.1} parent=39 // pred_region
        %s864 = smul.u32 8, %s24
        %p865 = scmp.lt.s32.totalorder %s22, 1
        %s866 = scalar_select %p865, %s22, 1
        %p867 = scmp.lt.s32.totalorder %s864, 7
        %s868 = scalar_select %p867, %s864, 7
        %p869 = scmp.lt.s32.totalorder %s23, 0
        %s870 = scalar_select %p869, %s23, 0
        %s871 = sadd.s32 %s870, %s868
        %s872 = smul.addr %s866, 8
        %s873 = sadd.s32 %s871, %s872
        %s874 = smul.addr %s873, 8
        %s875 = scalar_lea.vmem %s3, %s874
      $region44: #{discriminator_block_fwd.1} parent=39 // pred_fallthru
        _
    $region40: #{discriminator_block_fwd.1} parent=5 // pred_fallthru
      _
  $region6: #{discriminator_block_fwd.1} parent=0 // loop_footer
    %s13 = sadd.s32 1, %s9
  $region7: #{discriminator_block_fwd.1} parent=0 // loop_footer_branch
    %8 = sbr.rel target = $region3
  $region8: #{discriminator_block_fwd.1} parent=0 // loop_exit
    _

// kernel: discriminator_block_fwd.1
$region0: #{discriminator_block_fwd.1}
  #allocation0 [shape = 'u32[]', space=smem, size = 0x4, offset = 0x4, fixed_abs, tag = 'smem constant byte address 0x4 - core index']
  #allocation1 [shape = 'u32[72,128]{1,0:T(1,128)}', space=vmem, size = 0x9000, scoped, tag = 'internal scratch']
  %s0 = inlined_call_operand.vmem [shape: bf16[2,9,9,16], index: 0, kind: input, shape index: {}]
  %s1 = inlined_call_operand.vmem [shape: bf16[4,16,128], index: 1, kind: input, shape index: {}]
  %s2 = inlined_call_operand.vmem [shape: f32[1,128], index: 2, kind: input, shape index: {}]
  %s3 = inlined_call_operand.vmem [shape: f32[2,8,8,128], index: 3, kind: output, shape index: {}]
  %s4 = sld [smem:[#allocation0]]
  $region45: #{discriminator_block_fwd.1} parent=0
    _
  %s6 = ssub.s32 1, %s4
  %s7 = scalar_select 0, %s6, %s4
  loop: start=0, step=1, limit=4
  $region2: #{discriminator_block_fwd.1} parent=0 // loop_pre_header
    _
  $region3: #{discriminator_block_fwd.1} parent=0 // loop_header
    %s9 = sphi 0, %s13
    %p10 = scmp.ge.s32.totalorder %s9, 4
    %s16 = sphi 0, %s35
    %s17 = sphi 0, %s31
    %s18 = sphi 0, %s27
    %s19 = sphi 0, %s16
    %s20 = sphi 0, %s17
    %s21 = sphi 0, %s18
    %s22 = sphi 0, %s19
    %s23 = sphi 0, %s20
    %s24 = sphi 0, %s21
    %s38 = sphi 0, %s40
    %s41 = sphi 0, %s38
    %s42 = sphi 0, %s41
    %s58 = sphi 0, %s42
    %s64 = sphi 0, %s66
    %s67 = sphi 0, %s64
    %s68 = sphi 0, %s67
    %s84 = sphi 0, %s68
    %s90 = sphi 0, %s92
    %s93 = sphi 0, %s90
    %s94 = sphi 0, %s93
    %s110 = sphi 0, %s94
    %s120 = sphi 0, %s122
    %s123 = sphi 0, %s120
    %s124 = sphi 0, %s123
    %s140 = sphi 0, %s124
  $region4: #{discriminator_block_fwd.1} parent=0 // loop_header_branch
    %12 = sbr.rel (%p10) target = $region8
  $region5: #{discriminator_block_fwd.1} parent=0 // loop_body
    %s14 = ssub.s32 %s9, 1
    %s15 = ssub.s32 %s9, 2
    %s25 = sadd.s32 1, %s18
    %p26 = scmp.ge.s32.totalorder %s25, 1
    %s27 = scalar_select %p26, 0, %s25
    %s28 = sadd.s32 1, %s17
    %s29 = scalar_select %p26, %s28, %s17
    %p30 = scmp.ge.s32.totalorder %s29, 1
    %s31 = scalar_select %p30, 0, %s29
    %s32 = sadd.s32 1, %s16
    %s33 = scalar_select %p30, %s32, %s16
    %p34 = scmp.ge.s32.totalorder %s33, 2
    %s35 = scalar_select %p34, 0, %s33
    %s36 = ssub.s32 %s16, %s35
    %p37 = scmp.eq.s32.totalorder %s36, 0
    %s39 = sadd.s32 %s38, 1
    %s40 = scalar_select %p37, %s38, %s39
    %p43 = pneg %p37
    %p44 = scmp.eq.s32.totalorder %s9, 1
    %p45 = por %p43, %p44
    %p46 = scmp.ne.s32.totalorder %s38, %s41
    %p47 = scmp.eq.s32.totalorder %s9, 0
    %p48 = por %p46, %p47
    %p49 = scmp.ne.s32.totalorder %s38, %s41
    %p50 = scmp.eq.s32.totalorder %s14, 1
    %p51 = por %p49, %p50
    %p52 = scmp.ne.s32.totalorder %s41, %s42
    %p53 = scmp.eq.s32.totalorder %s14, 0
    %p54 = por %p52, %p53
    %p55 = scmp.ne.s32.totalorder %s41, %s42
    %p56 = scmp.eq.s32.totalorder %s15, 1
    %p57 = por %p55, %p56
    %p59 = scmp.ne.s32.totalorder %s42, %s58
    %p60 = scmp.eq.s32.totalorder %s15, 0
    %p61 = por %p59, %p60
    %s62 = ssub.s32 %s17, %s31
    %p63 = scmp.eq.s32.totalorder %s62, 0
    %s65 = sadd.s32 %s64, 1
    %s66 = scalar_select %p63, %s64, %s65
    %p69 = pneg %p63
    %p70 = scmp.eq.s32.totalorder %s9, 1
    %p71 = por %p69, %p70
    %p72 = scmp.ne.s32.totalorder %s64, %s67
    %p73 = scmp.eq.s32.totalorder %s9, 0
    %p74 = por %p72, %p73
    %p75 = scmp.ne.s32.totalorder %s64, %s67
    %p76 = scmp.eq.s32.totalorder %s14, 1
    %p77 = por %p75, %p76
    %p78 = scmp.ne.s32.totalorder %s67, %s68
    %p79 = scmp.eq.s32.totalorder %s14, 0
    %p80 = por %p78, %p79
    %p81 = scmp.ne.s32.totalorder %s67, %s68
    %p82 = scmp.eq.s32.totalorder %s15, 1
    %p83 = por %p81, %p82
    %p85 = scmp.ne.s32.totalorder %s68, %s84
    %p86 = scmp.eq.s32.totalorder %s15, 0
    %p87 = por %p85, %p86
    %s88 = ssub.s32 %s17, %s31
    %p89 = scmp.eq.s32.totalorder %s88, 0
    %s91 = sadd.s32 %s90, 1
    %s92 = scalar_select %p89, %s90, %s91
    %p95 = pneg %p89
    %p96 = scmp.eq.s32.totalorder %s9, 1
    %p97 = por %p95, %p96
    %p98 = scmp.ne.s32.totalorder %s90, %s93
    %p99 = scmp.eq.s32.totalorder %s9, 0
    %p100 = por %p98, %p99
    %p101 = scmp.ne.s32.totalorder %s90, %s93
    %p102 = scmp.eq.s32.totalorder %s14, 1
    %p103 = por %p101, %p102
    %p104 = scmp.ne.s32.totalorder %s93, %s94
    %p105 = scmp.eq.s32.totalorder %s14, 0
    %p106 = por %p104, %p105
    %p107 = scmp.ne.s32.totalorder %s93, %s94
    %p108 = scmp.eq.s32.totalorder %s15, 1
    %p109 = por %p107, %p108
    %p111 = scmp.ne.s32.totalorder %s94, %s110
    %p112 = scmp.eq.s32.totalorder %s15, 0
    %p113 = por %p111, %p112
    %s114 = ssub.s32 %s16, %s35
    %s115 = ssub.s32 %s18, %s27
    %s116 = sor.u32 %s114, %s115
    %s117 = ssub.s32 %s17, %s31
    %s118 = sor.u32 %s116, %s117
    %p119 = scmp.eq.s32.totalorder %s118, 0
    %s121 = sadd.s32 %s120, 1
    %s122 = scalar_select %p119, %s120, %s121
    %p125 = pneg %p119
    %p126 = scmp.eq.s32.totalorder %s9, 1
    %p127 = por %p125, %p126
    %p128 = scmp.ne.s32.totalorder %s120, %s123
    %p129 = scmp.eq.s32.totalorder %s9, 0
    %p130 = por %p128, %p129
    %p131 = scmp.ne.s32.totalorder %s120, %s123
    %p132 = scmp.eq.s32.totalorder %s14, 1
    %p133 = por %p131, %p132
    %p134 = scmp.ne.s32.totalorder %s123, %s124
    %p135 = scmp.eq.s32.totalorder %s14, 0
    %p136 = por %p134, %p135
    %p137 = scmp.ne.s32.totalorder %s123, %s124
    %p138 = scmp.eq.s32.totalorder %s15, 1
    %p139 = por %p137, %p138
    %p141 = scmp.ne.s32.totalorder %s124, %s140
    %p142 = scmp.eq.s32.totalorder %s15, 0
    %p143 = por %p141, %p142
    %p144 = scmp.le.s32.totalorder 1, %s9
    %p145 = scmp.lt.s32.totalorder %s9, 3
    %p146 = pnand %p144, %p145
    %p147 = pneg %p146
    // Predicated region
    $region9: #{discriminator_block_fwd.1} parent=5 // pred_check
      _
    $region10: #{discriminator_block_fwd.1} parent=5 // pred_check_branch
      %149 = sbr.rel (%p146) target = $region12
    $region11: #{discriminator_block_fwd.1} parent=5 // pred_region
      %s150 = ssub.s32 %s9, 1
      // Predicated region
      $region13: #{discriminator_block_fwd.1} parent=11 // pred_check
        %p151 = pneg %p80
      $region14: #{discriminator_block_fwd.1} parent=11 // pred_check_branch
        %153 = sbr.rel (%p151) target = $region16
      $region15: #{discriminator_block_fwd.1} parent=11 // pred_region
        %p154 = scmp.lt.s32.totalorder %s20, 0
        %s155 = scalar_select %p154, %s20, 0
        %s156 = smul.addr %s155, 4
        %s157 = scalar_lea.vmem %s1, %s156
      $region16: #{discriminator_block_fwd.1} parent=11 // pred_fallthru
        _
      // Predicated region
      $region17: #{discriminator_block_fwd.1} parent=11 // pred_check
        %p158 = pneg %p106
      $region18: #{discriminator_block_fwd.1} parent=11 // pred_check_branch
        %160 = sbr.rel (%p158) target = $region20
      $region19: #{discriminator_block_fwd.1} parent=11 // pred_region
        %p161 = scmp.lt.s32.totalorder %s20, 0
        %s162 = scalar_select %p161, %s20, 0
        %s163 = scalar_lea.vmem %s2, %s162
      $region20: #{discriminator_block_fwd.1} parent=11 // pred_fallthru
        _
    $region12: #{discriminator_block_fwd.1} parent=5 // pred_fallthru
      _
    %p164 = scmp.lt.s32.totalorder %s9, 2
    // Predicated region
    $region21: #{discriminator_block_fwd.1} parent=5 // pred_check
      %p165 = pneg %p164
    $region22: #{discriminator_block_fwd.1} parent=5 // pred_check_branch
      %167 = sbr.rel (%p165) target = $region24
    $region23: #{discriminator_block_fwd.1} parent=5 // pred_region
      // Predicated region
      $region25: #{discriminator_block_fwd.1} parent=23 // pred_check
        %p168 = pneg %p48
      $region26: #{discriminator_block_fwd.1} parent=23 // pred_check_branch
        %170 = sbr.rel (%p168) target = $region28
      $region27: #{discriminator_block_fwd.1} parent=23 // pred_region
        %p171 = scmp.lt.s32.totalorder %s16, 1
        %s172 = scalar_select %p171, %s16, 1
        %s173 = smul.addr %s172, 18
        %s174 = smul.addr %s173, 4
        %s175 = scalar_lea.vmem %s0, %s174
      $region28: #{discriminator_block_fwd.1} parent=23 // pred_fallthru
        _
    $region24: #{discriminator_block_fwd.1} parent=5 // pred_fallthru
      _
    %p176 = scmp.le.s32.totalorder 1, %s9
    %p177 = scmp.lt.s32.totalorder %s9, 3
    %p178 = pnand %p176, %p177
    %p179 = pneg %p178
    // Predicated region
    $region29: #{discriminator_block_fwd.1} parent=5 // pred_check
      _
    $region30: #{discriminator_block_fwd.1} parent=5 // pred_check_branch
      %181 = sbr.rel (%p178) target = $region32
    $region31: #{discriminator_block_fwd.1} parent=5 // pred_region
      %s182 = ssub.s32 %s9, 1
      %p183 = scmp.lt.s32.totalorder %s19, 1
      %s184 = scalar_select %p183, %s19, 1
      %s185 = smul.addr %s184, 18
      %s186 = smul.addr %s185, 4
      %s187 = scalar_lea.vmem %s0, %s186
      %p188 = pneg %p54
      %p189 = pneg %p51
      %p190 = scmp.lt.s32.totalorder %s20, 0
      %s191 = scalar_select %p190, %s20, 0
      %s192 = smul.addr %s191, 4
      %s193 = scalar_lea.vmem %s1, %s192
      %p194 = pneg %p80
      %p195 = pneg %p77
      %p196 = scmp.lt.s32.totalorder %s20, 0
      %s197 = scalar_select %p196, %s20, 0
      %s198 = scalar_lea.vmem %s2, %s197
      %p199 = pneg %p106
      %p200 = pneg %p103
      %p201 = pneg %p136
      %p202 = pneg %p133
      %s203 = smul.u32 8, %s21
      %p204 = scmp.lt.s32.totalorder %s19, 1
      %s205 = scalar_select %p204, %s19, 1
      %p206 = scmp.lt.s32.totalorder %s203, 7
      %s207 = scalar_select %p206, %s203, 7
      %p208 = scmp.lt.s32.totalorder %s20, 0
      %s209 = scalar_select %p208, %s20, 0
      %s210 = sadd.s32 %s209, %s207
      %s211 = smul.addr %s205, 8
      %s212 = sadd.s32 %s210, %s211
      %s213 = smul.addr %s212, 8
      %s214 = scalar_lea.vmem %s3, %s213
      %p215 = scmp.lt.s32.totalorder %s19, 1
      %s216 = scalar_select %p215, %s19, 1
      %s217 = smul.addr %s216, 18
      %s218 = smul.addr %s217, 4
      %s219 = scalar_lea.vmem %s0, %s218
      %p220 = scmp.lt.s32.totalorder %s20, 0
      %s221 = scalar_select %p220, %s20, 0
      %s222 = smul.addr %s221, 4
      %s223 = scalar_lea.vmem %s1, %s222
      %p224 = scmp.lt.s32.totalorder %s20, 0
      %s225 = scalar_select %p224, %s20, 0
      %s226 = scalar_lea.vmem %s2, %s225
      %s227 = smul.u32 8, %s21
      %p228 = scmp.lt.s32.totalorder %s19, 1
      %s229 = scalar_select %p228, %s19, 1
      %p230 = scmp.lt.s32.totalorder %s227, 7
      %s231 = scalar_select %p230, %s227, 7
      %p232 = scmp.lt.s32.totalorder %s20, 0
      %s233 = scalar_select %p232, %s20, 0
      %s234 = sadd.s32 %s233, %s231
      %s235 = smul.addr %s229, 8
      %s236 = sadd.s32 %s234, %s235
      %s237 = smul.addr %s236, 8
      %s238 = scalar_lea.vmem %s3, %s237
      %s239 = smul.u32 8, %s21
      %s241 = smul.u32 %s21, 8
      %s242 = smul.u32 %s241, 2
      %s243 = smul.addr %s242, 4
      %s244 = scalar_lea.vmem %s219, %s243
      %v245 = vld [vmem:[%s244] sm:$0xf]
      %v246 = vld [vmem:[%s244 + $0x8] sm:$0xf]
      %v247 = vld [vmem:[%s244 + $0x10] sm:$0xf]
      %v248 = vld [vmem:[%s244 + $0x18] sm:$0xf]
      %v249 = vld [vmem:[%s244 + $0x20] sm:$0xf]
      %v250 = vld [vmem:[%s244 + $0x28] sm:$0xf]
      %v251 = vld [vmem:[%s244 + $0x30] sm:$0xf]
      %v252 = vld [vmem:[%s244 + $0x38] sm:$0xf]
      %v253 = vld [vmem:[%s223] sm:$0xf]
      %v254 = vld [vmem:[%s223 + $0x4] sm:$0xf]
      %v255 = vld [vmem:[%s244 + $0x4] sm:$0x1]
      %v256 = vld [vmem:[%s244 + $0xc] sm:$0x1]
      %v257 = vld [vmem:[%s244 + $0x14] sm:$0x1]
      %v258 = vld [vmem:[%s244 + $0x1c] sm:$0x1]
      %v259 = vld [vmem:[%s244 + $0x24] sm:$0x1]
      %v260 = vld [vmem:[%s244 + $0x2c] sm:$0x1]
      %v261 = vld [vmem:[%s244 + $0x34] sm:$0x1]
      %v262 = vld [vmem:[%s244 + $0x3c] sm:$0x1]
      %vm263 = vsmask.f32 3328
      %vm264 = vsmask.f32 7440
      %vm265 = vmor %vm263, %vm264
      %v267 = vshrl.u32 %v245, 16
      %v269 = vrot.slane %v267, 4
      %v270 = vshll.u32 %v245, 16
      %v272 = vrot.slane %v270, 5
      %v273 = vor.u32 %v269, %v272
      %v274 = vrot.slane %v273, 4
      %v276 = vshll.u32 %v255, 16
      %v278 = vrot.slane %v276, 5
      %v279 = vsel %vm265, %v274, %v278
      %v281 = vshrl.u32 %v246, 16
      %v283 = vrot.slane %v281, 4
      %v284 = vshll.u32 %v246, 16
      %v286 = vrot.slane %v284, 5
      %v287 = vor.u32 %v283, %v286
      %v288 = vrot.slane %v287, 4
      %v290 = vshll.u32 %v256, 16
      %v292 = vrot.slane %v290, 5
      %v293 = vsel %vm265, %v288, %v292
      %v295 = vshrl.u32 %v247, 16
      %v297 = vrot.slane %v295, 4
      %v298 = vshll.u32 %v247, 16
      %v300 = vrot.slane %v298, 5
      %v301 = vor.u32 %v297, %v300
      %v302 = vrot.slane %v301, 4
      %v304 = vshll.u32 %v257, 16
      %v306 = vrot.slane %v304, 5
      %v307 = vsel %vm265, %v302, %v306
      %v309 = vshrl.u32 %v248, 16
      %v311 = vrot.slane %v309, 4
      %v312 = vshll.u32 %v248, 16
      %v314 = vrot.slane %v312, 5
      %v315 = vor.u32 %v311, %v314
      %v316 = vrot.slane %v315, 4
      %v318 = vshll.u32 %v258, 16
      %v320 = vrot.slane %v318, 5
      %v321 = vsel %vm265, %v316, %v320
      %v323 = vshrl.u32 %v249, 16
      %v325 = vrot.slane %v323, 4
      %v326 = vshll.u32 %v249, 16
      %v328 = vrot.slane %v326, 5
      %v329 = vor.u32 %v325, %v328
      %v330 = vrot.slane %v329, 4
      %v332 = vshll.u32 %v259, 16
      %v334 = vrot.slane %v332, 5
      %v335 = vsel %vm265, %v330, %v334
      %v337 = vshrl.u32 %v250, 16
      %v339 = vrot.slane %v337, 4
      %v340 = vshll.u32 %v250, 16
      %v342 = vrot.slane %v340, 5
      %v343 = vor.u32 %v339, %v342
      %v344 = vrot.slane %v343, 4
      %v346 = vshll.u32 %v260, 16
      %v348 = vrot.slane %v346, 5
      %v349 = vsel %vm265, %v344, %v348
      %v351 = vshrl.u32 %v251, 16
      %v353 = vrot.slane %v351, 4
      %v354 = vshll.u32 %v251, 16
      %v356 = vrot.slane %v354, 5
      %v357 = vor.u32 %v353, %v356
      %v358 = vrot.slane %v357, 4
      %v360 = vshll.u32 %v261, 16
      %v362 = vrot.slane %v360, 5
      %v363 = vsel %vm265, %v358, %v362
      %v365 = vshrl.u32 %v252, 16
      %v367 = vrot.slane %v365, 4
      %v368 = vshll.u32 %v252, 16
      %v370 = vrot.slane %v368, 5
      %v371 = vor.u32 %v367, %v370
      %v372 = vrot.slane %v371, 4
      %v374 = vshll.u32 %v262, 16
      %v376 = vrot.slane %v374, 5
      %v377 = vsel %vm265, %v372, %v376
      %s378 = scalar_lea.vmem %s223, 8
      %v379 = vld [vmem:[%s378] sm:$0xf]
      %v380 = vld [vmem:[%s378 + $0x4] sm:$0xf]
      %v381 = vunpack.c.l.b16 %v279
      %v382 = vunpack.c.l.b16 %v293
      %v383 = vunpack.c.l.b16 %v307
      %v384 = vunpack.c.l.b16 %v321
      %v385 = vunpack.c.l.b16 %v335
      %v386 = vunpack.c.l.b16 %v349
      %v387 = vunpack.c.l.b16 %v363
      %v388 = vunpack.c.l.b16 %v377
      %v389 = vpack.c.b16 %v382, %v381
      %v390 = vpack.c.b16 %v384, %v383
      %v391 = vpack.c.b16 %v386, %v385
      %v392 = vpack.c.b16 %v388, %v387
      %v395 = vunpack.c.l.b16 %v379
      %v396 = vunpack.c.l.b16 %v380
      %v397 = vpack.c.b16 %v396, %v395
      %vm399 = vcmask 130048
      %v401 = vsel %vm399, %v389, 0
      %v404 = vsel %vm399, %v390, 0
      %v407 = vsel %vm399, %v391, 0
      %v410 = vsel %vm399, %v392, 0
      %412 = vmatpush.bf16.msra.mxu0 0
      %413 = vmatpush.bf16.msra.mxu0 0
      %414 = vmatpush.bf16.msra.mxu0 0
      %415 = vmatpush.bf16.msra.mxu0 0
      %416 = vmatpush.bf16.msra.mxu0 0
      %417 = vmatpush.bf16.msra.mxu0 0
      %418 = vmatpush.bf16.msra.mxu0 0
      %419 = vmatpush.bf16.msra.mxu0 %v397
      %420 = vmatmul.bf16.gmra.mxu0 %v401
      %v421 = vpop.f32.mrf.mxu0
      %v422 = vadd.f32 0.0, %v421
      %v423 = vpop.f32.mrf.mxu0
      %v424 = vadd.f32 0.0, %v423
      %425 = vmatmul.bf16.gmra.mxu0 %v404
      %v426 = vpop.f32.mrf.mxu0
      %v427 = vadd.f32 0.0, %v426
      %v428 = vpop.f32.mrf.mxu0
      %v429 = vadd.f32 0.0, %v428
      %430 = vmatmul.bf16.gmra.mxu0 %v407
      %v431 = vpop.f32.mrf.mxu0
      %v432 = vadd.f32 0.0, %v431
      %v433 = vpop.f32.mrf.mxu0
      %v434 = vadd.f32 0.0, %v433
      %435 = vmatmul.bf16.gmra.mxu0 %v410
      %v436 = vpop.f32.mrf.mxu0
      %v437 = vadd.f32 0.0, %v436
      %v438 = vpop.f32.mrf.mxu0
      %v439 = vadd.f32 0.0, %v438
      %440 = vdwg.mxu0
      %v449 = vunpack.c.l.b16 %v245
      %v450 = vunpack.c.l.b16 %v246
      %v451 = vunpack.c.l.b16 %v247
      %v452 = vunpack.c.l.b16 %v248
      %v453 = vunpack.c.l.b16 %v249
      %v454 = vunpack.c.l.b16 %v250
      %v455 = vunpack.c.l.b16 %v251
      %v456 = vunpack.c.l.b16 %v252
      %v457 = vpack.c.b16 %v450, %v449
      %v458 = vpack.c.b16 %v452, %v451
      %v459 = vpack.c.b16 %v454, %v453
      %v460 = vpack.c.b16 %v456, %v455
      %v463 = vunpack.c.l.b16 %v253
      %v464 = vunpack.c.l.b16 %v254
      %v465 = vpack.c.b16 %v464, %v463
      %v468 = vsel %vm399, %v457, 0
      %v471 = vsel %vm399, %v458, 0
      %v474 = vsel %vm399, %v459, 0
      %v477 = vsel %vm399, %v460, 0
      %479 = vmatpush.bf16.msra.mxu0 0
      %480 = vmatpush.bf16.msra.mxu0 0
      %481 = vmatpush.bf16.msra.mxu0 0
      %482 = vmatpush.bf16.msra.mxu0 0
      %483 = vmatpush.bf16.msra.mxu0 0
      %484 = vmatpush.bf16.msra.mxu0 0
      %485 = vmatpush.bf16.msra.mxu0 0
      %486 = vmatpush.bf16.msra.mxu0 %v465
      %487 = vmatmul.bf16.gmra.mxu0 %v468
      %v488 = vpop.f32.mrf.mxu0
      %v489 = vadd.f32 %v422, %v488
      %v490 = vpop.f32.mrf.mxu0
      %v491 = vadd.f32 %v424, %v490
      %492 = vmatmul.bf16.gmra.mxu0 %v471
      %v493 = vpop.f32.mrf.mxu0
      %v494 = vadd.f32 %v427, %v493
      %v495 = vpop.f32.mrf.mxu0
      %v496 = vadd.f32 %v429, %v495
      %497 = vmatmul.bf16.gmra.mxu0 %v474
      %v498 = vpop.f32.mrf.mxu0
      %v499 = vadd.f32 %v432, %v498
      %v500 = vpop.f32.mrf.mxu0
      %v501 = vadd.f32 %v434, %v500
      %502 = vmatmul.bf16.gmra.mxu0 %v477
      %v503 = vpop.f32.mrf.mxu0
      %v504 = vadd.f32 %v437, %v503
      %v505 = vpop.f32.mrf.mxu0
      %v506 = vadd.f32 %v439, %v505
      %507 = vdwg.mxu0
      %s508 = sadd.s32 %s241, 1
      %s509 = smul.u32 %s508, 2
      %s510 = smul.addr %s509, 4
      %s511 = scalar_lea.vmem %s219, %s510
      %v512 = vld [vmem:[%s511] sm:$0xf]
      %v513 = vld [vmem:[%s511 + $0x8] sm:$0xf]
      %v514 = vld [vmem:[%s511 + $0x10] sm:$0xf]
      %v515 = vld [vmem:[%s511 + $0x18] sm:$0xf]
      %v516 = vld [vmem:[%s511 + $0x20] sm:$0xf]
      %v517 = vld [vmem:[%s511 + $0x28] sm:$0xf]
      %v518 = vld [vmem:[%s511 + $0x30] sm:$0xf]
      %v519 = vld [vmem:[%s511 + $0x38] sm:$0xf]
      %s520 = scalar_lea.vmem %s223, 16
      %v521 = vld [vmem:[%s520] sm:$0xf]
      %v522 = vld [vmem:[%s520 + $0x4] sm:$0xf]
      %v531 = vunpack.c.l.b16 %v512
      %v532 = vunpack.c.l.b16 %v513
      %v533 = vunpack.c.l.b16 %v514
      %v534 = vunpack.c.l.b16 %v515
      %v535 = vunpack.c.l.b16 %v516
      %v536 = vunpack.c.l.b16 %v517
      %v537 = vunpack.c.l.b16 %v518
      %v538 = vunpack.c.l.b16 %v519
      %v539 = vpack.c.b16 %v532, %v531
      %v540 = vpack.c.b16 %v534, %v533
      %v541 = vpack.c.b16 %v536, %v535
      %v542 = vpack.c.b16 %v538, %v537
      %v545 = vunpack.c.l.b16 %v521
      %v546 = vunpack.c.l.b16 %v522
      %v547 = vpack.c.b16 %v546, %v545
      %v550 = vsel %vm399, %v539, 0
      %v553 = vsel %vm399, %v540, 0
      %v556 = vsel %vm399, %v541, 0
      %v559 = vsel %vm399, %v542, 0
      %561 = vmatpush.bf16.msra.mxu0 0
      %562 = vmatpush.bf16.msra.mxu0 0
      %563 = vmatpush.bf16.msra.mxu0 0
      %564 = vmatpush.bf16.msra.mxu0 0
      %565 = vmatpush.bf16.msra.mxu0 0
      %566 = vmatpush.bf16.msra.mxu0 0
      %567 = vmatpush.bf16.msra.mxu0 0
      %568 = vmatpush.bf16.msra.mxu0 %v547
      %569 = vmatmul.bf16.gmra.mxu0 %v550
      %v570 = vpop.f32.mrf.mxu0
      %v571 = vadd.f32 0.0, %v570
      %v572 = vpop.f32.mrf.mxu0
      %v573 = vadd.f32 0.0, %v572
      %574 = vmatmul.bf16.gmra.mxu0 %v553
      %v575 = vpop.f32.mrf.mxu0
      %v576 = vadd.f32 0.0, %v575
      %v577 = vpop.f32.mrf.mxu0
      %v578 = vadd.f32 0.0, %v577
      %579 = vmatmul.bf16.gmra.mxu0 %v556
      %v580 = vpop.f32.mrf.mxu0
      %v581 = vadd.f32 0.0, %v580
      %v582 = vpop.f32.mrf.mxu0
      %v583 = vadd.f32 0.0, %v582
      %584 = vmatmul.bf16.gmra.mxu0 %v559
      %v585 = vpop.f32.mrf.mxu0
      %v586 = vadd.f32 0.0, %v585
      %v587 = vpop.f32.mrf.mxu0
      %v588 = vadd.f32 0.0, %v587
      %589 = vdwg.mxu0
      %v590 = vadd.f32 %v489, %v571
      %v591 = vadd.f32 %v491, %v573
      %v592 = vadd.f32 %v494, %v576
      %v593 = vadd.f32 %v496, %v578
      %v594 = vadd.f32 %v499, %v581
      %v595 = vadd.f32 %v501, %v583
      %v596 = vadd.f32 %v504, %v586
      %v597 = vadd.f32 %v506, %v588
      %v598 = vld [vmem:[%s511] sm:$0xf]
      %v599 = vld [vmem:[%s511 + $0x4] sm:$0x1]
      %v600 = vld [vmem:[%s511 + $0x8] sm:$0xf]
      %v601 = vld [vmem:[%s511 + $0xc] sm:$0x1]
      %v602 = vld [vmem:[%s511 + $0x10] sm:$0xf]
      %v603 = vld [vmem:[%s511 + $0x14] sm:$0x1]
      %v604 = vld [vmem:[%s511 + $0x18] sm:$0xf]
      %v605 = vld [vmem:[%s511 + $0x1c] sm:$0x1]
      %v606 = vld [vmem:[%s511 + $0x20] sm:$0xf]
      %v607 = vld [vmem:[%s511 + $0x24] sm:$0x1]
      %v608 = vld [vmem:[%s511 + $0x28] sm:$0xf]
      %v609 = vld [vmem:[%s511 + $0x2c] sm:$0x1]
      %v610 = vld [vmem:[%s511 + $0x30] sm:$0xf]
      %v611 = vld [vmem:[%s511 + $0x34] sm:$0x1]
      %v612 = vld [vmem:[%s511 + $0x38] sm:$0xf]
      %v613 = vld [vmem:[%s511 + $0x3c] sm:$0x1]
      %v615 = vshrl.u32 %v598, 16
      %v617 = vrot.slane %v615, 4
      %v618 = vshll.u32 %v598, 16
      %v620 = vrot.slane %v618, 5
      %v621 = vor.u32 %v617, %v620
      %v622 = vrot.slane %v621, 4
      %v624 = vshll.u32 %v599, 16
      %v626 = vrot.slane %v624, 5
      %v627 = vsel %vm265, %v622, %v626
      %v629 = vshrl.u32 %v600, 16
      %v631 = vrot.slane %v629, 4
      %v632 = vshll.u32 %v600, 16
      %v634 = vrot.slane %v632, 5
      %v635 = vor.u32 %v631, %v634
      %v636 = vrot.slane %v635, 4
      %v638 = vshll.u32 %v601, 16
      %v640 = vrot.slane %v638, 5
      %v641 = vsel %vm265, %v636, %v640
      %v643 = vshrl.u32 %v602, 16
      %v645 = vrot.slane %v643, 4
      %v646 = vshll.u32 %v602, 16
      %v648 = vrot.slane %v646, 5
      %v649 = vor.u32 %v645, %v648
      %v650 = vrot.slane %v649, 4
      %v652 = vshll.u32 %v603, 16
      %v654 = vrot.slane %v652, 5
      %v655 = vsel %vm265, %v650, %v654
      %v657 = vshrl.u32 %v604, 16
      %v659 = vrot.slane %v657, 4
      %v660 = vshll.u32 %v604, 16
      %v662 = vrot.slane %v660, 5
      %v663 = vor.u32 %v659, %v662
      %v664 = vrot.slane %v663, 4
      %v666 = vshll.u32 %v605, 16
      %v668 = vrot.slane %v666, 5
      %v669 = vsel %vm265, %v664, %v668
      %v671 = vshrl.u32 %v606, 16
      %v673 = vrot.slane %v671, 4
      %v674 = vshll.u32 %v606, 16
      %v676 = vrot.slane %v674, 5
      %v677 = vor.u32 %v673, %v676
      %v678 = vrot.slane %v677, 4
      %v680 = vshll.u32 %v607, 16
      %v682 = vrot.slane %v680, 5
      %v683 = vsel %vm265, %v678, %v682
      %v685 = vshrl.u32 %v608, 16
      %v687 = vrot.slane %v685, 4
      %v688 = vshll.u32 %v608, 16
      %v690 = vrot.slane %v688, 5
      %v691 = vor.u32 %v687, %v690
      %v692 = vrot.slane %v691, 4
      %v694 = vshll.u32 %v609, 16
      %v696 = vrot.slane %v694, 5
      %v697 = vsel %vm265, %v692, %v696
      %v699 = vshrl.u32 %v610, 16
      %v701 = vrot.slane %v699, 4
      %v702 = vshll.u32 %v610, 16
      %v704 = vrot.slane %v702, 5
      %v705 = vor.u32 %v701, %v704
      %v706 = vrot.slane %v705, 4
      %v708 = vshll.u32 %v611, 16
      %v710 = vrot.slane %v708, 5
      %v711 = vsel %vm265, %v706, %v710
      %v713 = vshrl.u32 %v612, 16
      %v715 = vrot.slane %v713, 4
      %v716 = vshll.u32 %v612, 16
      %v718 = vrot.slane %v716, 5
      %v719 = vor.u32 %v715, %v718
      %v720 = vrot.slane %v719, 4
      %v722 = vshll.u32 %v613, 16
      %v724 = vrot.slane %v722, 5
      %v725 = vsel %vm265, %v720, %v724
      %s726 = scalar_lea.vmem %s223, 24
      %v727 = vld [vmem:[%s726] sm:$0xf]
      %v728 = vld [vmem:[%s726 + $0x4] sm:$0xf]
      %v729 = vunpack.c.l.b16 %v627
      %v730 = vunpack.c.l.b16 %v641
      %v731 = vunpack.c.l.b16 %v655
      %v732 = vunpack.c.l.b16 %v669
      %v733 = vunpack.c.l.b16 %v683
      %v734 = vunpack.c.l.b16 %v697
      %v735 = vunpack.c.l.b16 %v711
      %v736 = vunpack.c.l.b16 %v725
      %v737 = vpack.c.b16 %v730, %v729
      %v738 = vpack.c.b16 %v732, %v731
      %v739 = vpack.c.b16 %v734, %v733
      %v740 = vpack.c.b16 %v736, %v735
      %v743 = vunpack.c.l.b16 %v727
      %v744 = vunpack.c.l.b16 %v728
      %v745 = vpack.c.b16 %v744, %v743
      %v748 = vsel %vm399, %v737, 0
      %v751 = vsel %vm399, %v738, 0
      %v754 = vsel %vm399, %v739, 0
      %v757 = vsel %vm399, %v740, 0
      %759 = vmatpush.bf16.msra.mxu0 0
      %760 = vmatpush.bf16.msra.mxu0 0
      %761 = vmatpush.bf16.msra.mxu0 0
      %762 = vmatpush.bf16.msra.mxu0 0
      %763 = vmatpush.bf16.msra.mxu0 0
      %764 = vmatpush.bf16.msra.mxu0 0
      %765 = vmatpush.bf16.msra.mxu0 0
      %766 = vmatpush.bf16.msra.mxu0 %v745
      %767 = vmatmul.bf16.gmra.mxu0 %v748
      %v768 = vpop.f32.mrf.mxu0
      %v769 = vadd.f32 0.0, %v768
      %v770 = vpop.f32.mrf.mxu0
      %v771 = vadd.f32 0.0, %v770
      %772 = vmatmul.bf16.gmra.mxu0 %v751
      %v773 = vpop.f32.mrf.mxu0
      %v774 = vadd.f32 0.0, %v773
      %v775 = vpop.f32.mrf.mxu0
      %v776 = vadd.f32 0.0, %v775
      %777 = vmatmul.bf16.gmra.mxu0 %v754
      %v778 = vpop.f32.mrf.mxu0
      %v779 = vadd.f32 0.0, %v778
      %v780 = vpop.f32.mrf.mxu0
      %v781 = vadd.f32 0.0, %v780
      %782 = vmatmul.bf16.gmra.mxu0 %v757
      %v783 = vpop.f32.mrf.mxu0
      %v784 = vadd.f32 0.0, %v783
      %v785 = vpop.f32.mrf.mxu0
      %v786 = vadd.f32 0.0, %v785
      %787 = vdwg.mxu0
      %v788 = vadd.f32 %v590, %v769
      %v789 = vadd.f32 %v591, %v771
      %v790 = vadd.f32 %v592, %v774
      %v791 = vadd.f32 %v593, %v776
      %v792 = vadd.f32 %v594, %v779
      %v793 = vadd.f32 %v595, %v781
      %v794 = vadd.f32 %v596, %v784
      %v795 = vadd.f32 %v597, %v786
      %v796 = vld [vmem:[%s226] sm:$0x1]
      %v798 = vperm.slane %v796, 0
      %v800 = vadd.f32 %v788, %v798
      %v801 = vadd.f32 %v789, %v798
      %v802 = vadd.f32 %v790, %v798
      %v803 = vadd.f32 %v791, %v798
      %v804 = vadd.f32 %v792, %v798
      %v805 = vadd.f32 %v793, %v798
      %v806 = vadd.f32 %v794, %v798
      %v807 = vadd.f32 %v795, %v798
      %vm808 = vcmp.ge.f32.partialorder %v800, 0.0
      %vm809 = vcmp.ge.f32.partialorder %v801, 0.0
      %vm810 = vcmp.ge.f32.partialorder %v802, 0.0
      %vm811 = vcmp.ge.f32.partialorder %v803, 0.0
      %vm812 = vcmp.ge.f32.partialorder %v804, 0.0
      %vm813 = vcmp.ge.f32.partialorder %v805, 0.0
      %vm814 = vcmp.ge.f32.partialorder %v806, 0.0
      %vm815 = vcmp.ge.f32.partialorder %v807, 0.0
      %v816 = vmul.f32 %v800, 0.2
      %v817 = vmul.f32 %v801, 0.2
      %v818 = vmul.f32 %v802, 0.2
      %v819 = vmul.f32 %v803, 0.2
      %v820 = vmul.f32 %v804, 0.2
      %v821 = vmul.f32 %v805, 0.2
      %v822 = vmul.f32 %v806, 0.2
      %v823 = vmul.f32 %v807, 0.2
      %v824 = vsel %vm808, %v800, %v816
      %v825 = vsel %vm809, %v801, %v817
      %v826 = vsel %vm810, %v802, %v818
      %v827 = vsel %vm811, %v803, %v819
      %v828 = vsel %vm812, %v804, %v820
      %v829 = vsel %vm813, %v805, %v821
      %v830 = vsel %vm814, %v806, %v822
      %v831 = vsel %vm815, %v807, %v823
      %832 = vst [vmem:[%s238] sm:$0xff] %v824
      %833 = vst [vmem:[%s238 + $0x8] sm:$0xff] %v825
      %834 = vst [vmem:[%s238 + $0x10] sm:$0xff] %v826
      %835 = vst [vmem:[%s238 + $0x18] sm:$0xff] %v827
      %836 = vst [vmem:[%s238 + $0x20] sm:$0xff] %v828
      %837 = vst [vmem:[%s238 + $0x28] sm:$0xff] %v829
      %838 = vst [vmem:[%s238 + $0x30] sm:$0xff] %v830
      %839 = vst [vmem:[%s238 + $0x38] sm:$0xff] %v831
      %s840 = smul.u32 8, %s21
      %p841 = scmp.lt.s32.totalorder %s19, 1
      %s842 = scalar_select %p841, %s19, 1
      %p843 = scmp.lt.s32.totalorder %s840, 7
      %s844 = scalar_select %p843, %s840, 7
      %p845 = scmp.lt.s32.totalorder %s20, 0
      %s846 = scalar_select %p845, %s20, 0
      %s847 = sadd.s32 %s846, %s844
      %s848 = smul.addr %s842, 8
      %s849 = sadd.s32 %s847, %s848
      %s850 = smul.addr %s849, 8
      %s851 = scalar_lea.vmem %s3, %s850
      // Predicated region
      $region33: #{discriminator_block_fwd.1} parent=31 // pred_check
        %p852 = pneg %p133
      $region34: #{discriminator_block_fwd.1} parent=31 // pred_check_branch
        %854 = sbr.rel (%p852) target = $region36
      $region35: #{discriminator_block_fwd.1} parent=31 // pred_region
        %s855 = smul.u32 8, %s21
      $region36: #{discriminator_block_fwd.1} parent=31 // pred_fallthru
        _
    $region32: #{discriminator_block_fwd.1} parent=5 // pred_fallthru
      _
    %p856 = scmp.le.s32.totalorder 2, %s9
    // Predicated region
    $region37: #{discriminator_block_fwd.1} parent=5 // pred_check
      %p857 = pneg %p856
    $region38: #{discriminator_block_fwd.1} parent=5 // pred_check_branch
      %859 = sbr.rel (%p857) target = $region40
    $region39: #{discriminator_block_fwd.1} parent=5 // pred_region
      %s860 = ssub.s32 %s9, 2
      // Predicated region
      $region41: #{discriminator_block_fwd.1} parent=39 // pred_check
        %p861 = pneg %p139
      $region42: #{discriminator_block_fwd.1} parent=39 // pred_check_branch
        %863 = sbr.rel (%p861) target = $region44
      $region43: #{discriminator_block_fwd.1} parent=39 // pred_region
        %s864 = smul.u32 8, %s24
        %p865 = scmp.lt.s32.totalorder %s22, 1
        %s866 = scalar_select %p865, %s22, 1
        %p867 = scmp.lt.s32.totalorder %s864, 7
        %s868 = scalar_select %p867, %s864, 7
        %p869 = scmp.lt.s32.totalorder %s23, 0
        %s870 = scalar_select %p869, %s23, 0
        %s871 = sadd.s32 %s870, %s868
        %s872 = smul.addr %s866, 8
        %s873 = sadd.s32 %s871, %s872
        %s874 = smul.addr %s873, 8
        %s875 = scalar_lea.vmem %s3, %s874
      $region44: #{discriminator_block_fwd.1} parent=39 // pred_fallthru
        _
    $region40: #{discriminator_block_fwd.1} parent=5 // pred_fallthru
      _
  $region6: #{discriminator_block_fwd.1} parent=0 // loop_footer
    %s13 = sadd.s32 1, %s9
  $region7: #{discriminator_block_fwd.1} parent=0 // loop_footer_branch
    %8 = sbr.rel target = $region3
  $region8: #{discriminator_block_fwd.1} parent=0 // loop_exit
    _

</llo_original>
